<compile_context>
chip_gen: v7x
topology: tpu7x:2x2x1
jax: 0.10.0
libtpu: 0.0.40
codegen_flags: <defaults>
</compile_context>

<pallas_src>
import jax
import jax.numpy as jnp
import numpy as np
from jax.experimental import pallas as pl
from jax.experimental.pallas import tpu as pltpu

PAD = 0


def _selector_kernel(w_ref, s_ref, back_ref, bg_ref, out_ref):
    """One (TB batch rows) x (TL background positions) tile per grid step.

    w_ref    : VMEM (1, H)      f32  -- back_enc slice of the Linear weight (lanes = H)
    s_ref    : VMEM (TB, 1, 1)  f32  -- hoisted per-row scalar: state·w_state + word·w_word + bias
    back_ref : VMEM (TB, TL, H)      -- back_enc tile, NATIVE layout (no transpose)
    bg_ref   : VMEM (TB, 1, TL) i32  -- background token ids, lane-dense over L
    out_ref  : VMEM (TB, 1, TL) f32  -- scores, lane-dense over L
    """
    w = w_ref[...].astype(jnp.float32)                      # (1, H)
    back = back_ref[...].astype(jnp.float32)                # (TB, TL, H)
    # VPU broadcast-multiply of w over H, then reduce over H -> (TB, TL).
    # (Deliberately not an M=1 MXU matvec: with a fresh RHS every tile the
    #  weight-push cycles can exceed the HBM fetch time on v6e/v7x.)
    score = jnp.sum(back * w, axis=-1)                       # (TB, TL)
    # Add the per-row hoisted scalar and apply masked_fill(bg == PAD, -inf),
    # both lane-dense over L; store the full (TB, 1, TL) block unmasked.
    score = score[:, None, :] + s_ref[...]                   # (TB, 1, TL)
    out_ref[...] = jnp.where(bg_ref[...] == PAD, -jnp.inf, score)


def _round_up(x, m):
    return (x + m - 1) // m * m


def _pick_tiles(B, L, H, itemsize, budget_bytes=24 * 1024 * 1024):
    """Pick (TB, TL).  TL is a multiple of 128 (target 512) for unmasked,
    lane-dense stores; TB packs several batch rows per grid step to amortize
    the ~0.35us fixed per-step overhead; the double-buffered back_enc working
    set (+ f32 temps) is kept under ~24 MiB so it fits v7x's smaller VMEM."""
    TL = min(512, _round_up(L, 128))
    TB = min(8, max(1, B))
    per_elem = 2 * itemsize + 8        # 2 pipeline buffers + f32 cast/mul temporaries
    while TB > 1 and TB * TL * H * per_elem > budget_bytes:
        TB -= 1
    while TL > 128 and TB * TL * H * per_elem > budget_bytes:
        TL -= 128
    return TB, TL


def selector_forward(back_enc, last_state, last_word, background, embed, weight, bias):
    """back_enc: (B, L, H); last_state: tuple whose [0] is (B, 1, H);
    last_word: (B, 1) int32 token ids; background: (B, L) int32 token ids."""
    state = last_state[0]                                     # (B, 1, H)
    B, L, H = back_enc.shape
    itemsize = jnp.dtype(back_enc.dtype).itemsize

    # TODO(synk): self.encoder is a full BertEncoder; replaced here by a deterministic
    # embedding-table lookup standing in for encoder(last_word, is_dec=True).
    word_embed = embed[last_word[:, 0]]                       # (B, H)

    # torch nn.Linear weight is (1, 3H); x @ W.T == x @ W.reshape(3H)
    w = weight.reshape(3 * H).astype(jnp.float32)
    w_state, w_word, w_back = w[:H], w[H:2 * H], w[2 * H:]

    # Hoist the per-batch scalar out of the kernel (tiny, done once in XLA).
    s = (state[:, 0, :].astype(jnp.float32) @ w_state
         + word_embed.astype(jnp.float32) @ w_word
         + bias[0].astype(jnp.float32))                       # (B,)

    TB, TL = _pick_tiles(B, L, H, itemsize)
    LP = _round_up(L, TL)
    n_l = LP // TL
    # Keep at least 2 "parallel" grid steps so both TensorCores are fed on v7x.
    if B >= 2 and pl.cdiv(B, TB) * n_l < 2:
        TB = pl.cdiv(B, 2)
    BP = _round_up(B, TB)

    # Native (B, L, H) layout preserved: no transpose of back_enc.  Padding is
    # only materialized for ragged shapes; padded lanes/rows are masked with
    # PAD (-> -inf) and sliced off below, so their values never matter.
    back_p = back_enc
    bg = background.astype(jnp.int32)
    s_p = s
    if BP != B or LP != L:
        back_p = jnp.pad(back_enc, ((0, BP - B), (0, LP - L), (0, 0)))
        bg = jnp.pad(bg, ((0, BP - B), (0, LP - L)), constant_values=PAD)
        s_p = jnp.pad(s, (0, BP - B))

    bg3 = bg[:, None, :]                                      # (BP, 1, LP), L on lanes
    s3 = s_p.reshape(BP, 1, 1).astype(jnp.float32)            # (BP, 1, 1)
    w_row = w_back.reshape(1, H)                               # (1, H), kept f32

    cost = pl.CostEstimate(
        flops=2 * BP * LP * H,
        transcendentals=0,
        bytes_accessed=BP * LP * H * itemsize + 2 * BP * LP * 4,
    )

    out = pl.pallas_call(
        _selector_kernel,
        out_shape=jax.ShapeDtypeStruct((BP, 1, LP), jnp.float32),
        grid_spec=pltpu.PrefetchScalarGridSpec(
            num_scalar_prefetch=0,
            grid=(BP // TB, n_l),
            in_specs=[
                pl.BlockSpec((1, H), lambda ib, il: (0, 0)),            # w_back row (fetched once)
                pl.BlockSpec((TB, 1, 1), lambda ib, il: (ib, 0, 0)),    # hoisted per-row scalars
                pl.BlockSpec((TB, TL, H), lambda ib, il: (ib, il, 0)),  # back_enc, native layout
                pl.BlockSpec((TB, 1, TL), lambda ib, il: (ib, 0, il)),  # background ids
            ],
            out_specs=pl.BlockSpec((TB, 1, TL), lambda ib, il: (ib, 0, il)),
        ),
        compiler_params=pltpu.CompilerParams(
            dimension_semantics=("parallel", "parallel")),
        cost_estimate=cost,
    )(w_row, s3, back_p, bg3)

    return out[:B, 0, :L]                                     # (B, L)


def selector_reference(back_enc, last_state, last_word, background, embed, weight, bias):
    state = last_state[0]
    B, L, H = back_enc.shape
    word_embed = embed[last_word[:, 0]][:, None, :]
    inp = jnp.concatenate([jnp.broadcast_to(state, (B, L, H)),
                           jnp.broadcast_to(word_embed, (B, L, H)),
                           back_enc.astype(jnp.float32)], axis=-1)     # (B, L, 3H)
    out = (inp @ weight.reshape(3 * H, 1) + bias)[..., 0]              # (B, L)
    return jnp.where(background == PAD, -jnp.inf, out)


if __name__ == "__main__":
    B, L, H, V = 2, 16, 32, 50   # batch, background length, hidden, vocab

    key = jax.random.PRNGKey(0)
    k1, k2, k3, k4, k5, k6 = jax.random.split(key, 6)

    back_enc = jax.random.normal(k1, (B, L, H), dtype=jnp.float32)
    last_state = (jax.random.normal(k2, (B, 1, H), dtype=jnp.float32),)   # tuple, [0] used
    last_word = jax.random.randint(k3, (B, 1), 1, V, dtype=jnp.int32)
    background = jax.random.randint(k4, (B, L), 1, V, dtype=jnp.int32)
    background = background.at[:, -3:].set(PAD)              # padded tail to exercise the mask

    # Deterministic parameters (matches init_weights: weight ~ N(0, 0.02), bias = 0)
    embed = 0.02 * jax.random.normal(k5, (V, H), dtype=jnp.float32)
    weight = 0.02 * jax.random.normal(k6, (1, 3 * H), dtype=jnp.float32)
    bias = jnp.zeros((1,), dtype=jnp.float32)

    out = selector_forward(back_enc, last_state, last_word, background, embed, weight, bias)
    out = jax.block_until_ready(out)

    ref = selector_reference(back_enc, last_state, last_word, background, embed, weight, bias)
    out_np, ref_np = np.asarray(out), np.asarray(ref)
    assert out_np.shape == (B, L)
    finite = np.isfinite(ref_np)
    assert np.array_equal(np.isneginf(out_np), np.isneginf(ref_np))
    assert np.allclose(out_np[finite], ref_np[finite], atol=1e-5, rtol=1e-5)

    print("KERNEL_OK")
</pallas_src>

<mosaic_0001>
module attributes {stable_mosaic.version = 11 : i64} {
  func.func @_selector_kernel(%arg0: i32, %arg1: i32, %arg2: memref<1x32xf32, #tpu.memory_space<vmem>>, %arg3: memref<1x1x1xf32, #tpu.memory_space<vmem>>, %arg4: memref<1x128x32xf32, #tpu.memory_space<vmem>>, %arg5: memref<1x1x128xi32, #tpu.memory_space<vmem>>, %arg6: memref<1x1x128xf32, #tpu.memory_space<vmem>>) attributes {dimension_semantics = [#tpu.dimension_semantics<parallel>, #tpu.dimension_semantics<parallel>], iteration_bounds = array<i64: 2, 1>, scalar_prefetch = 0 : i64, scratch_operands = 0 : i64, tpu.core_type = #tpu.core_type<tc>, window_params = [{pipeline_mode = #tpu.pipeline_mode<synchronous>, transform_indices = @transform_0, window_bounds = array<i64: 1, 32>}, {transform_indices = @transform_1, window_bounds = array<i64: 1, 1, 1>}, {transform_indices = @transform_2, window_bounds = array<i64: 1, 128, 32>}, {transform_indices = @transform_3, window_bounds = array<i64: 1, 1, 128>}, {transform_indices = @transform_4, window_bounds = array<i64: 1, 1, 128>}]} {
    %c0 = arith.constant 0 : index
    %c0_0 = arith.constant 0 : index
    %0 = vector.load %arg2[%c0, %c0_0] : memref<1x32xf32, #tpu.memory_space<vmem>>, vector<1x32xf32>
    %c0_1 = arith.constant 0 : index
    %c0_2 = arith.constant 0 : index
    %c0_3 = arith.constant 0 : index
    %1 = vector.load %arg4[%c0_1, %c0_2, %c0_3] : memref<1x128x32xf32, #tpu.memory_space<vmem>>, vector<1x128x32xf32>
    %2 = vector.shape_cast %0 : vector<1x32xf32> to vector<1x1x32xf32>
    %3 = vector.broadcast %2 : vector<1x1x32xf32> to vector<1x128x32xf32>
    %4 = arith.mulf %1, %3 : vector<1x128x32xf32>
    %cst = arith.constant dense<0.000000e+00> : vector<1x128xf32>
    %5 = vector.multi_reduction <add>, %4, %cst [2] : vector<1x128x32xf32> to vector<1x128xf32>
    %6 = vector.shape_cast %5 : vector<1x128xf32> to vector<1x1x128xf32>
    %c0_4 = arith.constant 0 : index
    %c0_5 = arith.constant 0 : index
    %c0_6 = arith.constant 0 : index
    %7 = vector.load %arg3[%c0_4, %c0_5, %c0_6] : memref<1x1x1xf32, #tpu.memory_space<vmem>>, vector<1x1x1xf32>
    %8 = vector.broadcast %7 : vector<1x1x1xf32> to vector<1x1x128xf32>
    %9 = arith.addf %6, %8 : vector<1x1x128xf32>
    %c0_7 = arith.constant 0 : index
    %c0_8 = arith.constant 0 : index
    %c0_9 = arith.constant 0 : index
    %10 = vector.load %arg5[%c0_7, %c0_8, %c0_9] : memref<1x1x128xi32, #tpu.memory_space<vmem>>, vector<1x1x128xi32>
    %c0_i32 = arith.constant 0 : i32
    %11 = vector.broadcast %c0_i32 : i32 to vector<1x1x128xi32>
    %12 = arith.cmpi eq, %10, %11 : vector<1x1x128xi32>
    %cst_10 = arith.constant 0xFF800000 : f32
    %13 = vector.broadcast %cst_10 : f32 to vector<1x1x128xf32>
    %14 = arith.select %12, %13, %9 : vector<1x1x128xi1>, vector<1x1x128xf32>
    %c0_11 = arith.constant 0 : index
    %c0_12 = arith.constant 0 : index
    %c0_13 = arith.constant 0 : index
    %15 = vector.load %arg6[%c0_11, %c0_12, %c0_13] : memref<1x1x128xf32, #tpu.memory_space<vmem>>, vector<1x1x128xf32>
    tpu.vector_store %arg6[%c0_11, %c0_12, %c0_13], %14 {strides = array<i32>} : memref<1x1x128xf32, #tpu.memory_space<vmem>>, vector<1x1x128xf32>,
    return
  }
  func.func @transform_0(%arg0: i32, %arg1: i32) -> (i32, i32) {
    %c0_i32 = arith.constant 0 : i32
    %c0_i32_0 = arith.constant 0 : i32
    %c0_i32_1 = arith.constant 0 : i32
    return %c0_i32, %c0_i32_0 : i32, i32
  }
  func.func @transform_1(%arg0: i32, %arg1: i32) -> (i32, i32, i32) {
    %c0_i32 = arith.constant 0 : i32
    %c0_i32_0 = arith.constant 0 : i32
    %c0_i32_1 = arith.constant 0 : i32
    return %arg0, %c0_i32, %c0_i32_0 : i32, i32, i32
  }
  func.func @transform_2(%arg0: i32, %arg1: i32) -> (i32, i32, i32) {
    %c0_i32 = arith.constant 0 : i32
    %c0_i32_0 = arith.constant 0 : i32
    return %arg0, %arg1, %c0_i32 : i32, i32, i32
  }
  func.func @transform_3(%arg0: i32, %arg1: i32) -> (i32, i32, i32) {
    %c0_i32 = arith.constant 0 : i32
    %c0_i32_0 = arith.constant 0 : i32
    return %arg0, %c0_i32, %arg1 : i32, i32, i32
  }
  func.func @transform_4(%arg0: i32, %arg1: i32) -> (i32, i32, i32) {
    %c0_i32 = arith.constant 0 : i32
    %c0_i32_0 = arith.constant 0 : i32
    return %arg0, %c0_i32, %arg1 : i32, i32, i32
  }
}

</mosaic_0001>

<llo_original>
// kernel: tpu_custom_call.1
$region0: #{tpu_custom_call.1}
  #allocation0 [shape = 'u32[]', space=smem, size = 0x4, offset = 0x4, fixed_abs, tag = 'smem constant byte address 0x4 - core index']
  #allocation1 [shape = 'u32[144,128]{1,0:T(1,128)}', space=vmem, size = 0x12000, scoped, tag = 'internal scratch']
  %s0 = inlined_call_operand.vmem [shape: f32[1,32], index: 0, kind: input, shape index: {}]
  %s1 = inlined_call_operand.vmem [shape: f32[2,1,1], index: 1, kind: input, shape index: {}]
  %s2 = inlined_call_operand.vmem [shape: f32[2,128,32], index: 2, kind: input, shape index: {}]
  %s3 = inlined_call_operand.vmem [shape: s32[2,1,128], index: 3, kind: input, shape index: {}]
  %s4 = inlined_call_operand.hbm [shape: f32[2,1,128], index: 4, kind: output, shape index: {}]
  %s5 = sld [smem:[#allocation0]]
  $region49: #{tpu_custom_call.1} parent=0
    _
  %s7 = ssub.s32 1, %s5
  %s8 = scalar_select 0, %s7, %s5
  $region1: #{tpu_custom_call.1} parent=0
    #allocation2 [shape = 'u8[1024]{0}', space=vmem, size = 0x400, scoped, tag = 'output window, operand 0']
    #allocation3 [shape = 's32[2]{0}', space=sflag, size = 0x8, scoped, tag = 'scoped memory for tpu_custom_call.1']
    %9 = vsyncpa [#allocation3], 0
    %s10 = scalar_lea.sflag [#allocation3], 1
    %11 = vsyncpa %s10, 0
    loop: start=0, step=1, limit=4
    $region2: #{tpu_custom_call.1} parent=1 // loop_pre_header
      _
    $region3: #{tpu_custom_call.1} parent=1 // loop_header
      %s13 = sphi 0, %s17
      %p14 = scmp.ge.s32.totalorder %s13, 4
      %s20 = sphi 0, %s32
      %s21 = sphi 0, %s28
      %s22 = sphi 0, %s20
      %s23 = sphi 0, %s21
      %s24 = sphi 0, %s22
      %s25 = sphi 0, %s23
      %s33 = sphi 0, %s33
      %s35 = sphi 0, %s33
      %s36 = sphi 0, %s35
      %s50 = sphi 0, %s36
      %s56 = sphi 0, %s58
      %s59 = sphi 0, %s56
      %s60 = sphi 0, %s59
      %s76 = sphi 0, %s60
      %s84 = sphi 0, %s86
      %s87 = sphi 0, %s84
      %s88 = sphi 0, %s87
      %s104 = sphi 0, %s88
      %s112 = sphi 0, %s114
      %s115 = sphi 0, %s112
      %s116 = sphi 0, %s115
      %s132 = sphi 0, %s116
      %s140 = sphi 0, %s142
      %s143 = sphi 0, %s140
      %s144 = sphi 0, %s143
      %s160 = sphi 0, %s144
    $region4: #{tpu_custom_call.1} parent=1 // loop_header_branch
      %16 = sbr.rel (%p14) target = $region8
    $region5: #{tpu_custom_call.1} parent=1 // loop_body
      %s18 = ssub.s32 %s13, 1
      %s19 = ssub.s32 %s13, 2
      %s26 = sadd.s32 1, %s21
      %p27 = scmp.ge.s32.totalorder %s26, 1
      %s28 = scalar_select %p27, 0, %s26
      %s29 = sadd.s32 1, %s20
      %s30 = scalar_select %p27, %s29, %s20
      %p31 = scmp.ge.s32.totalorder %s30, 2
      %s32 = scalar_select %p31, 0, %s30
      %s34 = sadd.s32 %s33, 1
      %p37 = scmp.eq.s32.totalorder %s13, 1
      %p38 = scmp.ne.s32.totalorder %s33, %s35
      %p39 = scmp.eq.s32.totalorder %s13, 0
      %p40 = por %p38, %p39
      %p41 = scmp.ne.s32.totalorder %s33, %s35
      %p42 = scmp.eq.s32.totalorder %s18, 1
      %p43 = por %p41, %p42
      %p44 = scmp.ne.s32.totalorder %s35, %s36
      %p45 = scmp.eq.s32.totalorder %s18, 0
      %p46 = por %p44, %p45
      %p47 = scmp.ne.s32.totalorder %s35, %s36
      %p48 = scmp.eq.s32.totalorder %s19, 1
      %p49 = por %p47, %p48
      %p51 = scmp.ne.s32.totalorder %s36, %s50
      %p52 = scmp.eq.s32.totalorder %s19, 0
      %p53 = por %p51, %p52
      %s54 = ssub.s32 %s20, %s32
      %p55 = scmp.eq.s32.totalorder %s54, 0
      %s57 = sadd.s32 %s56, 1
      %s58 = scalar_select %p55, %s56, %s57
      %p61 = pneg %p55
      %p62 = scmp.eq.s32.totalorder %s13, 1
      %p63 = por %p61, %p62
      %p64 = scmp.ne.s32.totalorder %s56, %s59
      %p65 = scmp.eq.s32.totalorder %s13, 0
      %p66 = por %p64, %p65
      %p67 = scmp.ne.s32.totalorder %s56, %s59
      %p68 = scmp.eq.s32.totalorder %s18, 1
      %p69 = por %p67, %p68
      %p70 = scmp.ne.s32.totalorder %s59, %s60
      %p71 = scmp.eq.s32.totalorder %s18, 0
      %p72 = por %p70, %p71
      %p73 = scmp.ne.s32.totalorder %s59, %s60
      %p74 = scmp.eq.s32.totalorder %s19, 1
      %p75 = por %p73, %p74
      %p77 = scmp.ne.s32.totalorder %s60, %s76
      %p78 = scmp.eq.s32.totalorder %s19, 0
      %p79 = por %p77, %p78
      %s80 = ssub.s32 %s20, %s32
      %s81 = ssub.s32 %s21, %s28
      %s82 = sor.u32 %s80, %s81
      %p83 = scmp.eq.s32.totalorder %s82, 0
      %s85 = sadd.s32 %s84, 1
      %s86 = scalar_select %p83, %s84, %s85
      %p89 = pneg %p83
      %p90 = scmp.eq.s32.totalorder %s13, 1
      %p91 = por %p89, %p90
      %p92 = scmp.ne.s32.totalorder %s84, %s87
      %p93 = scmp.eq.s32.totalorder %s13, 0
      %p94 = por %p92, %p93
      %p95 = scmp.ne.s32.totalorder %s84, %s87
      %p96 = scmp.eq.s32.totalorder %s18, 1
      %p97 = por %p95, %p96
      %p98 = scmp.ne.s32.totalorder %s87, %s88
      %p99 = scmp.eq.s32.totalorder %s18, 0
      %p100 = por %p98, %p99
      %p101 = scmp.ne.s32.totalorder %s87, %s88
      %p102 = scmp.eq.s32.totalorder %s19, 1
      %p103 = por %p101, %p102
      %p105 = scmp.ne.s32.totalorder %s88, %s104
      %p106 = scmp.eq.s32.totalorder %s19, 0
      %p107 = por %p105, %p106
      %s108 = ssub.s32 %s20, %s32
      %s109 = ssub.s32 %s21, %s28
      %s110 = sor.u32 %s108, %s109
      %p111 = scmp.eq.s32.totalorder %s110, 0
      %s113 = sadd.s32 %s112, 1
      %s114 = scalar_select %p111, %s112, %s113
      %p117 = pneg %p111
      %p118 = scmp.eq.s32.totalorder %s13, 1
      %p119 = por %p117, %p118
      %p120 = scmp.ne.s32.totalorder %s112, %s115
      %p121 = scmp.eq.s32.totalorder %s13, 0
      %p122 = por %p120, %p121
      %p123 = scmp.ne.s32.totalorder %s112, %s115
      %p124 = scmp.eq.s32.totalorder %s18, 1
      %p125 = por %p123, %p124
      %p126 = scmp.ne.s32.totalorder %s115, %s116
      %p127 = scmp.eq.s32.totalorder %s18, 0
      %p128 = por %p126, %p127
      %p129 = scmp.ne.s32.totalorder %s115, %s116
      %p130 = scmp.eq.s32.totalorder %s19, 1
      %p131 = por %p129, %p130
      %p133 = scmp.ne.s32.totalorder %s116, %s132
      %p134 = scmp.eq.s32.totalorder %s19, 0
      %p135 = por %p133, %p134
      %s136 = ssub.s32 %s20, %s32
      %s137 = ssub.s32 %s21, %s28
      %s138 = sor.u32 %s136, %s137
      %p139 = scmp.eq.s32.totalorder %s138, 0
      %s141 = sadd.s32 %s140, 1
      %s142 = scalar_select %p139, %s140, %s141
      %p145 = pneg %p139
      %p146 = scmp.eq.s32.totalorder %s13, 1
      %p147 = por %p145, %p146
      %p148 = scmp.ne.s32.totalorder %s140, %s143
      %p149 = scmp.eq.s32.totalorder %s13, 0
      %p150 = por %p148, %p149
      %p151 = scmp.ne.s32.totalorder %s140, %s143
      %p152 = scmp.eq.s32.totalorder %s18, 1
      %p153 = por %p151, %p152
      %p154 = scmp.ne.s32.totalorder %s143, %s144
      %p155 = scmp.eq.s32.totalorder %s18, 0
      %p156 = por %p154, %p155
      %p157 = scmp.ne.s32.totalorder %s143, %s144
      %p158 = scmp.eq.s32.totalorder %s19, 1
      %p159 = por %p157, %p158
      %p161 = scmp.ne.s32.totalorder %s144, %s160
      %p162 = scmp.eq.s32.totalorder %s19, 0
      %p163 = por %p161, %p162
      %p164 = scmp.le.s32.totalorder 1, %s13
      %p165 = scmp.lt.s32.totalorder %s13, 3
      %p166 = pnand %p164, %p165
      %p167 = pneg %p166
      // Predicated region
      $region9: #{tpu_custom_call.1} parent=5 // pred_check
        _
      $region10: #{tpu_custom_call.1} parent=5 // pred_check_branch
        %169 = sbr.rel (%p166) target = $region12
      $region11: #{tpu_custom_call.1} parent=5 // pred_region
        %s170 = ssub.s32 %s13, 1
        // Predicated region
        $region13: #{tpu_custom_call.1} parent=11 // pred_check
          %p171 = pneg %p46
        $region14: #{tpu_custom_call.1} parent=11 // pred_check_branch
          %173 = sbr.rel (%p171) target = $region16
        $region15: #{tpu_custom_call.1} parent=11 // pred_region
          _
        $region16: #{tpu_custom_call.1} parent=11 // pred_fallthru
          _
      $region12: #{tpu_custom_call.1} parent=5 // pred_fallthru
        _
      %p174 = scmp.lt.s32.totalorder %s13, 2
      // Predicated region
      $region17: #{tpu_custom_call.1} parent=5 // pred_check
        %p175 = pneg %p174
      $region18: #{tpu_custom_call.1} parent=5 // pred_check_branch
        %177 = sbr.rel (%p175) target = $region20
      $region19: #{tpu_custom_call.1} parent=5 // pred_region
        // Predicated region
        $region21: #{tpu_custom_call.1} parent=19 // pred_check
          %p178 = pneg %p66
        $region22: #{tpu_custom_call.1} parent=19 // pred_check_branch
          %180 = sbr.rel (%p178) target = $region24
        $region23: #{tpu_custom_call.1} parent=19 // pred_region
          %p181 = scmp.lt.s32.totalorder %s20, 1
          %s182 = scalar_select %p181, %s20, 1
          %s183 = scalar_lea.vmem %s1, %s182
        $region24: #{tpu_custom_call.1} parent=19 // pred_fallthru
          _
        // Predicated region
        $region25: #{tpu_custom_call.1} parent=19 // pred_check
          %p184 = pneg %p94
        $region26: #{tpu_custom_call.1} parent=19 // pred_check_branch
          %186 = sbr.rel (%p184) target = $region28
        $region27: #{tpu_custom_call.1} parent=19 // pred_region
          %s187 = smul.u32 16, %s21
          %p188 = scmp.lt.s32.totalorder %s20, 1
          %s189 = scalar_select %p188, %s20, 1
          %p190 = scmp.lt.s32.totalorder %s187, 15
          %s191 = scalar_select %p190, %s187, 15
          %s192 = smul.addr %s189, 16
          %s193 = sadd.s32 %s191, %s192
          %s194 = smul.addr %s193, 8
          %s195 = scalar_lea.vmem %s2, %s194
          %s196 = smul.u32 16, %s21
        $region28: #{tpu_custom_call.1} parent=19 // pred_fallthru
          _
        // Predicated region
        $region29: #{tpu_custom_call.1} parent=19 // pred_check
          %p197 = pneg %p122
        $region30: #{tpu_custom_call.1} parent=19 // pred_check_branch
          %199 = sbr.rel (%p197) target = $region32
        $region31: #{tpu_custom_call.1} parent=19 // pred_region
          %p200 = scmp.lt.s32.totalorder %s20, 1
          %s201 = scalar_select %p200, %s20, 1
          %p202 = scmp.lt.s32.totalorder %s21, 0
          %s203 = scalar_select %p202, %s21, 0
          %s204 = sadd.s32 %s203, %s201
          %s205 = scalar_lea.vmem %s3, %s204
        $region32: #{tpu_custom_call.1} parent=19 // pred_fallthru
          _
      $region20: #{tpu_custom_call.1} parent=5 // pred_fallthru
        _
      %p206 = scmp.le.s32.totalorder 1, %s13
      %p207 = scmp.lt.s32.totalorder %s13, 3
      %p208 = pnand %p206, %p207
      %p209 = pneg %p208
      // Predicated region
      $region33: #{tpu_custom_call.1} parent=5 // pred_check
        _
      $region34: #{tpu_custom_call.1} parent=5 // pred_check_branch
        %211 = sbr.rel (%p208) target = $region36
      $region35: #{tpu_custom_call.1} parent=5 // pred_region
        %s212 = ssub.s32 %s13, 1
        %p213 = pneg %p46
        %p214 = pneg %p43
        %p215 = scmp.lt.s32.totalorder %s22, 1
        %s216 = scalar_select %p215, %s22, 1
        %s217 = scalar_lea.vmem %s1, %s216
        %p218 = pneg %p72
        %p219 = pneg %p69
        %s220 = smul.u32 16, %s23
        %p221 = scmp.lt.s32.totalorder %s22, 1
        %s222 = scalar_select %p221, %s22, 1
        %p223 = scmp.lt.s32.totalorder %s220, 15
        %s224 = scalar_select %p223, %s220, 15
        %s225 = smul.addr %s222, 16
        %s226 = sadd.s32 %s224, %s225
        %s227 = smul.addr %s226, 8
        %s228 = scalar_lea.vmem %s2, %s227
        %p229 = pneg %p100
        %p230 = pneg %p97
        %p231 = scmp.lt.s32.totalorder %s22, 1
        %s232 = scalar_select %p231, %s22, 1
        %p233 = scmp.lt.s32.totalorder %s23, 0
        %s234 = scalar_select %p233, %s23, 0
        %s235 = sadd.s32 %s234, %s232
        %s236 = scalar_lea.vmem %s3, %s235
        %p237 = pneg %p128
        %p238 = pneg %p125
        %p239 = pneg %p156
        %p240 = pneg %p153
        %s241 = sand.u32 %s143, 1
        %s242 = scalar_lea.sflag [#allocation3], %s241
        %s243 = sand.u32 %s143, 1
        %s244 = scalar_lea.vmem [#allocation2], %s243
        %p245 = scmp.lt.s32.totalorder %s22, 1
        %s246 = scalar_select %p245, %s22, 1
        %s247 = scalar_lea.vmem %s1, %s246
        %s248 = smul.u32 16, %s23
        %p249 = scmp.lt.s32.totalorder %s22, 1
        %s250 = scalar_select %p249, %s22, 1
        %p251 = scmp.lt.s32.totalorder %s248, 15
        %s252 = scalar_select %p251, %s248, 15
        %s253 = smul.addr %s250, 16
        %s254 = sadd.s32 %s252, %s253
        %s255 = smul.addr %s254, 8
        %s256 = scalar_lea.vmem %s2, %s255
        %s257 = smul.u32 16, %s23
        %p258 = scmp.lt.s32.totalorder %s22, 1
        %s259 = scalar_select %p258, %s22, 1
        %p260 = scmp.lt.s32.totalorder %s23, 0
        %s261 = scalar_select %p260, %s23, 0
        %s262 = sadd.s32 %s261, %s259
        %s263 = scalar_lea.vmem %s3, %s262
        %v264 = vld [vmem:[%s0] sm:$0x1]
        %v265 = vld [vmem:[%s256] sm:$0xff]
        %v266 = vld [vmem:[%s256 + $0x8] sm:$0xff]
        %v267 = vld [vmem:[%s256 + $0x10] sm:$0xff]
        %v268 = vld [vmem:[%s256 + $0x18] sm:$0xff]
        %v269 = vld [vmem:[%s256 + $0x20] sm:$0xff]
        %v270 = vld [vmem:[%s256 + $0x28] sm:$0xff]
        %v271 = vld [vmem:[%s256 + $0x30] sm:$0xff]
        %v272 = vld [vmem:[%s256 + $0x38] sm:$0xff]
        %v273 = vld [vmem:[%s256 + $0x40] sm:$0xff]
        %v274 = vld [vmem:[%s256 + $0x48] sm:$0xff]
        %v275 = vld [vmem:[%s256 + $0x50] sm:$0xff]
        %v276 = vld [vmem:[%s256 + $0x58] sm:$0xff]
        %v277 = vld [vmem:[%s256 + $0x60] sm:$0xff]
        %v278 = vld [vmem:[%s256 + $0x68] sm:$0xff]
        %v279 = vld [vmem:[%s256 + $0x70] sm:$0xff]
        %v280 = vld [vmem:[%s256 + $0x78] sm:$0xff]
        %v282 = vlaneseq
        %v283 = vshrl.u32 %v282, 7
        %v284 = vsub.s32 0, %v283
        %v285 = vrot.slane %v264, %v284
        %v287 = vmul.f32 %v265, %v285
        %v288 = vmul.f32 %v266, %v285
        %v289 = vmul.f32 %v267, %v285
        %v290 = vmul.f32 %v268, %v285
        %v291 = vmul.f32 %v269, %v285
        %v292 = vmul.f32 %v270, %v285
        %v293 = vmul.f32 %v271, %v285
        %v294 = vmul.f32 %v272, %v285
        %v295 = vmul.f32 %v273, %v285
        %v296 = vmul.f32 %v274, %v285
        %v297 = vmul.f32 %v275, %v285
        %v298 = vmul.f32 %v276, %v285
        %v299 = vmul.f32 %v277, %v285
        %v300 = vmul.f32 %v278, %v285
        %v301 = vmul.f32 %v279, %v285
        %v302 = vmul.f32 %v280, %v285
        %vm303 = vcmask 261120
        %v304 = vsel %vm303, %v287, 0.0
        %305 = vadd.xlane.f32.xlu0 %v304
        %v306 = vpop.xlane.xlu0 %305
        %v307 = vsel %vm303, %v288, 0.0
        %308 = vadd.xlane.f32.xlu0 %v307
        %v309 = vpop.xlane.xlu0 %308
        %v310 = vsel %vm303, %v289, 0.0
        %311 = vadd.xlane.f32.xlu0 %v310
        %v312 = vpop.xlane.xlu0 %311
        %v313 = vsel %vm303, %v290, 0.0
        %314 = vadd.xlane.f32.xlu0 %v313
        %v315 = vpop.xlane.xlu0 %314
        %v316 = vsel %vm303, %v291, 0.0
        %317 = vadd.xlane.f32.xlu0 %v316
        %v318 = vpop.xlane.xlu0 %317
        %v319 = vsel %vm303, %v292, 0.0
        %320 = vadd.xlane.f32.xlu0 %v319
        %v321 = vpop.xlane.xlu0 %320
        %v322 = vsel %vm303, %v293, 0.0
        %323 = vadd.xlane.f32.xlu0 %v322
        %v324 = vpop.xlane.xlu0 %323
        %v325 = vsel %vm303, %v294, 0.0
        %326 = vadd.xlane.f32.xlu0 %v325
        %v327 = vpop.xlane.xlu0 %326
        %v328 = vsel %vm303, %v295, 0.0
        %329 = vadd.xlane.f32.xlu0 %v328
        %v330 = vpop.xlane.xlu0 %329
        %v331 = vsel %vm303, %v296, 0.0
        %332 = vadd.xlane.f32.xlu0 %v331
        %v333 = vpop.xlane.xlu0 %332
        %v334 = vsel %vm303, %v297, 0.0
        %335 = vadd.xlane.f32.xlu0 %v334
        %v336 = vpop.xlane.xlu0 %335
        %v337 = vsel %vm303, %v298, 0.0
        %338 = vadd.xlane.f32.xlu0 %v337
        %v339 = vpop.xlane.xlu0 %338
        %v340 = vsel %vm303, %v299, 0.0
        %341 = vadd.xlane.f32.xlu0 %v340
        %v342 = vpop.xlane.xlu0 %341
        %v343 = vsel %vm303, %v300, 0.0
        %344 = vadd.xlane.f32.xlu0 %v343
        %v345 = vpop.xlane.xlu0 %344
        %v346 = vsel %vm303, %v301, 0.0
        %347 = vadd.xlane.f32.xlu0 %v346
        %v348 = vpop.xlane.xlu0 %347
        %v349 = vsel %vm303, %v302, 0.0
        %350 = vadd.xlane.f32.xlu0 %v349
        %v351 = vpop.xlane.xlu0 %350
        %v352 = vld [vmem:[%s247] sm:$0x1]
        %354 = vset.pattern.permute.xlu0 0
        %355 = vperm.xlu0 %354, %v352
        %v356 = vpop.permute.xlu0 %355
        %v358 = vlaneseq
        %v359 = vshrl.u32 %v358, 7
        %v360 = vsub.s32 0, %v359
        %v361 = vrot.slane %v356, %v360
        %v362 = vadd.f32 %v306, %v361
        %v363 = vadd.f32 %v309, %v361
        %v364 = vadd.f32 %v312, %v361
        %v365 = vadd.f32 %v315, %v361
        %v366 = vadd.f32 %v318, %v361
        %v367 = vadd.f32 %v321, %v361
        %v368 = vadd.f32 %v324, %v361
        %v369 = vadd.f32 %v327, %v361
        %v370 = vadd.f32 %v330, %v361
        %v371 = vadd.f32 %v333, %v361
        %v372 = vadd.f32 %v336, %v361
        %v373 = vadd.f32 %v339, %v361
        %v374 = vadd.f32 %v342, %v361
        %v375 = vadd.f32 %v345, %v361
        %v376 = vadd.f32 %v348, %v361
        %v377 = vadd.f32 %v351, %v361
        %v378 = vld [vmem:[%s263] sm:$0x1]
        %vm379 = vcmp.eq.s32.totalorder %v378, 0
        %v396 = vlaneseq
        %v397 = vshrl.u32 %v396, 7
        %v398 = vsub.s32 0, %v397
        %v399 = vrot.slane %v362, %v398
        %v400 = vlaneseq
        %v401 = vshrl.u32 %v400, 7
        %v402 = vsub.s32 1, %v401
        %v403 = vrot.slane %v362, %v402
        %v404 = vlaneseq
        %v405 = vshrl.u32 %v404, 7
        %v406 = vsub.s32 2, %v405
        %v407 = vrot.slane %v362, %v406
        %v408 = vlaneseq
        %v409 = vshrl.u32 %v408, 7
        %v410 = vsub.s32 3, %v409
        %v411 = vrot.slane %v362, %v410
        %v412 = vlaneseq
        %v413 = vshrl.u32 %v412, 7
        %v414 = vsub.s32 4, %v413
        %v415 = vrot.slane %v362, %v414
        %v416 = vlaneseq
        %v417 = vshrl.u32 %v416, 7
        %v418 = vsub.s32 5, %v417
        %v419 = vrot.slane %v362, %v418
        %v420 = vlaneseq
        %v421 = vshrl.u32 %v420, 7
        %v422 = vsub.s32 6, %v421
        %v423 = vrot.slane %v362, %v422
        %v424 = vlaneseq
        %v425 = vshrl.u32 %v424, 7
        %v426 = vsub.s32 7, %v425
        %v427 = vrot.slane %v362, %v426
        %v428 = vlaneseq
        %v429 = vshrl.u32 %v428, 7
        %v430 = vsub.s32 0, %v429
        %v431 = vrot.slane %v363, %v430
        %v432 = vlaneseq
        %v433 = vshrl.u32 %v432, 7
        %v434 = vsub.s32 1, %v433
        %v435 = vrot.slane %v363, %v434
        %v436 = vlaneseq
        %v437 = vshrl.u32 %v436, 7
        %v438 = vsub.s32 2, %v437
        %v439 = vrot.slane %v363, %v438
        %v440 = vlaneseq
        %v441 = vshrl.u32 %v440, 7
        %v442 = vsub.s32 3, %v441
        %v443 = vrot.slane %v363, %v442
        %v444 = vlaneseq
        %v445 = vshrl.u32 %v444, 7
        %v446 = vsub.s32 4, %v445
        %v447 = vrot.slane %v363, %v446
        %v448 = vlaneseq
        %v449 = vshrl.u32 %v448, 7
        %v450 = vsub.s32 5, %v449
        %v451 = vrot.slane %v363, %v450
        %v452 = vlaneseq
        %v453 = vshrl.u32 %v452, 7
        %v454 = vsub.s32 6, %v453
        %v455 = vrot.slane %v363, %v454
        %v456 = vlaneseq
        %v457 = vshrl.u32 %v456, 7
        %v458 = vsub.s32 7, %v457
        %v459 = vrot.slane %v363, %v458
        %v460 = vlaneseq
        %v461 = vshrl.u32 %v460, 7
        %v462 = vsub.s32 0, %v461
        %v463 = vrot.slane %v364, %v462
        %v464 = vlaneseq
        %v465 = vshrl.u32 %v464, 7
        %v466 = vsub.s32 1, %v465
        %v467 = vrot.slane %v364, %v466
        %v468 = vlaneseq
        %v469 = vshrl.u32 %v468, 7
        %v470 = vsub.s32 2, %v469
        %v471 = vrot.slane %v364, %v470
        %v472 = vlaneseq
        %v473 = vshrl.u32 %v472, 7
        %v474 = vsub.s32 3, %v473
        %v475 = vrot.slane %v364, %v474
        %v476 = vlaneseq
        %v477 = vshrl.u32 %v476, 7
        %v478 = vsub.s32 4, %v477
        %v479 = vrot.slane %v364, %v478
        %v480 = vlaneseq
        %v481 = vshrl.u32 %v480, 7
        %v482 = vsub.s32 5, %v481
        %v483 = vrot.slane %v364, %v482
        %v484 = vlaneseq
        %v485 = vshrl.u32 %v484, 7
        %v486 = vsub.s32 6, %v485
        %v487 = vrot.slane %v364, %v486
        %v488 = vlaneseq
        %v489 = vshrl.u32 %v488, 7
        %v490 = vsub.s32 7, %v489
        %v491 = vrot.slane %v364, %v490
        %v492 = vlaneseq
        %v493 = vshrl.u32 %v492, 7
        %v494 = vsub.s32 0, %v493
        %v495 = vrot.slane %v365, %v494
        %v496 = vlaneseq
        %v497 = vshrl.u32 %v496, 7
        %v498 = vsub.s32 1, %v497
        %v499 = vrot.slane %v365, %v498
        %v500 = vlaneseq
        %v501 = vshrl.u32 %v500, 7
        %v502 = vsub.s32 2, %v501
        %v503 = vrot.slane %v365, %v502
        %v504 = vlaneseq
        %v505 = vshrl.u32 %v504, 7
        %v506 = vsub.s32 3, %v505
        %v507 = vrot.slane %v365, %v506
        %v508 = vlaneseq
        %v509 = vshrl.u32 %v508, 7
        %v510 = vsub.s32 4, %v509
        %v511 = vrot.slane %v365, %v510
        %v512 = vlaneseq
        %v513 = vshrl.u32 %v512, 7
        %v514 = vsub.s32 5, %v513
        %v515 = vrot.slane %v365, %v514
        %v516 = vlaneseq
        %v517 = vshrl.u32 %v516, 7
        %v518 = vsub.s32 6, %v517
        %v519 = vrot.slane %v365, %v518
        %v520 = vlaneseq
        %v521 = vshrl.u32 %v520, 7
        %v522 = vsub.s32 7, %v521
        %v523 = vrot.slane %v365, %v522
        %v524 = vlaneseq
        %v525 = vshrl.u32 %v524, 7
        %v526 = vsub.s32 0, %v525
        %v527 = vrot.slane %v366, %v526
        %v528 = vlaneseq
        %v529 = vshrl.u32 %v528, 7
        %v530 = vsub.s32 1, %v529
        %v531 = vrot.slane %v366, %v530
        %v532 = vlaneseq
        %v533 = vshrl.u32 %v532, 7
        %v534 = vsub.s32 2, %v533
        %v535 = vrot.slane %v366, %v534
        %v536 = vlaneseq
        %v537 = vshrl.u32 %v536, 7
        %v538 = vsub.s32 3, %v537
        %v539 = vrot.slane %v366, %v538
        %v540 = vlaneseq
        %v541 = vshrl.u32 %v540, 7
        %v542 = vsub.s32 4, %v541
        %v543 = vrot.slane %v366, %v542
        %v544 = vlaneseq
        %v545 = vshrl.u32 %v544, 7
        %v546 = vsub.s32 5, %v545
        %v547 = vrot.slane %v366, %v546
        %v548 = vlaneseq
        %v549 = vshrl.u32 %v548, 7
        %v550 = vsub.s32 6, %v549
        %v551 = vrot.slane %v366, %v550
        %v552 = vlaneseq
        %v553 = vshrl.u32 %v552, 7
        %v554 = vsub.s32 7, %v553
        %v555 = vrot.slane %v366, %v554
        %v556 = vlaneseq
        %v557 = vshrl.u32 %v556, 7
        %v558 = vsub.s32 0, %v557
        %v559 = vrot.slane %v367, %v558
        %v560 = vlaneseq
        %v561 = vshrl.u32 %v560, 7
        %v562 = vsub.s32 1, %v561
        %v563 = vrot.slane %v367, %v562
        %v564 = vlaneseq
        %v565 = vshrl.u32 %v564, 7
        %v566 = vsub.s32 2, %v565
        %v567 = vrot.slane %v367, %v566
        %v568 = vlaneseq
        %v569 = vshrl.u32 %v568, 7
        %v570 = vsub.s32 3, %v569
        %v571 = vrot.slane %v367, %v570
        %v572 = vlaneseq
        %v573 = vshrl.u32 %v572, 7
        %v574 = vsub.s32 4, %v573
        %v575 = vrot.slane %v367, %v574
        %v576 = vlaneseq
        %v577 = vshrl.u32 %v576, 7
        %v578 = vsub.s32 5, %v577
        %v579 = vrot.slane %v367, %v578
        %v580 = vlaneseq
        %v581 = vshrl.u32 %v580, 7
        %v582 = vsub.s32 6, %v581
        %v583 = vrot.slane %v367, %v582
        %v584 = vlaneseq
        %v585 = vshrl.u32 %v584, 7
        %v586 = vsub.s32 7, %v585
        %v587 = vrot.slane %v367, %v586
        %v588 = vlaneseq
        %v589 = vshrl.u32 %v588, 7
        %v590 = vsub.s32 0, %v589
        %v591 = vrot.slane %v368, %v590
        %v592 = vlaneseq
        %v593 = vshrl.u32 %v592, 7
        %v594 = vsub.s32 1, %v593
        %v595 = vrot.slane %v368, %v594
        %v596 = vlaneseq
        %v597 = vshrl.u32 %v596, 7
        %v598 = vsub.s32 2, %v597
        %v599 = vrot.slane %v368, %v598
        %v600 = vlaneseq
        %v601 = vshrl.u32 %v600, 7
        %v602 = vsub.s32 3, %v601
        %v603 = vrot.slane %v368, %v602
        %v604 = vlaneseq
        %v605 = vshrl.u32 %v604, 7
        %v606 = vsub.s32 4, %v605
        %v607 = vrot.slane %v368, %v606
        %v608 = vlaneseq
        %v609 = vshrl.u32 %v608, 7
        %v610 = vsub.s32 5, %v609
        %v611 = vrot.slane %v368, %v610
        %v612 = vlaneseq
        %v613 = vshrl.u32 %v612, 7
        %v614 = vsub.s32 6, %v613
        %v615 = vrot.slane %v368, %v614
        %v616 = vlaneseq
        %v617 = vshrl.u32 %v616, 7
        %v618 = vsub.s32 7, %v617
        %v619 = vrot.slane %v368, %v618
        %v620 = vlaneseq
        %v621 = vshrl.u32 %v620, 7
        %v622 = vsub.s32 0, %v621
        %v623 = vrot.slane %v369, %v622
        %v624 = vlaneseq
        %v625 = vshrl.u32 %v624, 7
        %v626 = vsub.s32 1, %v625
        %v627 = vrot.slane %v369, %v626
        %v628 = vlaneseq
        %v629 = vshrl.u32 %v628, 7
        %v630 = vsub.s32 2, %v629
        %v631 = vrot.slane %v369, %v630
        %v632 = vlaneseq
        %v633 = vshrl.u32 %v632, 7
        %v634 = vsub.s32 3, %v633
        %v635 = vrot.slane %v369, %v634
        %v636 = vlaneseq
        %v637 = vshrl.u32 %v636, 7
        %v638 = vsub.s32 4, %v637
        %v639 = vrot.slane %v369, %v638
        %v640 = vlaneseq
        %v641 = vshrl.u32 %v640, 7
        %v642 = vsub.s32 5, %v641
        %v643 = vrot.slane %v369, %v642
        %v644 = vlaneseq
        %v645 = vshrl.u32 %v644, 7
        %v646 = vsub.s32 6, %v645
        %v647 = vrot.slane %v369, %v646
        %v648 = vlaneseq
        %v649 = vshrl.u32 %v648, 7
        %v650 = vsub.s32 7, %v649
        %v651 = vrot.slane %v369, %v650
        %v652 = vlaneseq
        %v653 = vshrl.u32 %v652, 7
        %v654 = vsub.s32 0, %v653
        %v655 = vrot.slane %v370, %v654
        %v656 = vlaneseq
        %v657 = vshrl.u32 %v656, 7
        %v658 = vsub.s32 1, %v657
        %v659 = vrot.slane %v370, %v658
        %v660 = vlaneseq
        %v661 = vshrl.u32 %v660, 7
        %v662 = vsub.s32 2, %v661
        %v663 = vrot.slane %v370, %v662
        %v664 = vlaneseq
        %v665 = vshrl.u32 %v664, 7
        %v666 = vsub.s32 3, %v665
        %v667 = vrot.slane %v370, %v666
        %v668 = vlaneseq
        %v669 = vshrl.u32 %v668, 7
        %v670 = vsub.s32 4, %v669
        %v671 = vrot.slane %v370, %v670
        %v672 = vlaneseq
        %v673 = vshrl.u32 %v672, 7
        %v674 = vsub.s32 5, %v673
        %v675 = vrot.slane %v370, %v674
        %v676 = vlaneseq
        %v677 = vshrl.u32 %v676, 7
        %v678 = vsub.s32 6, %v677
        %v679 = vrot.slane %v370, %v678
        %v680 = vlaneseq
        %v681 = vshrl.u32 %v680, 7
        %v682 = vsub.s32 7, %v681
        %v683 = vrot.slane %v370, %v682
        %v684 = vlaneseq
        %v685 = vshrl.u32 %v684, 7
        %v686 = vsub.s32 0, %v685
        %v687 = vrot.slane %v371, %v686
        %v688 = vlaneseq
        %v689 = vshrl.u32 %v688, 7
        %v690 = vsub.s32 1, %v689
        %v691 = vrot.slane %v371, %v690
        %v692 = vlaneseq
        %v693 = vshrl.u32 %v692, 7
        %v694 = vsub.s32 2, %v693
        %v695 = vrot.slane %v371, %v694
        %v696 = vlaneseq
        %v697 = vshrl.u32 %v696, 7
        %v698 = vsub.s32 3, %v697
        %v699 = vrot.slane %v371, %v698
        %v700 = vlaneseq
        %v701 = vshrl.u32 %v700, 7
        %v702 = vsub.s32 4, %v701
        %v703 = vrot.slane %v371, %v702
        %v704 = vlaneseq
        %v705 = vshrl.u32 %v704, 7
        %v706 = vsub.s32 5, %v705
        %v707 = vrot.slane %v371, %v706
        %v708 = vlaneseq
        %v709 = vshrl.u32 %v708, 7
        %v710 = vsub.s32 6, %v709
        %v711 = vrot.slane %v371, %v710
        %v712 = vlaneseq
        %v713 = vshrl.u32 %v712, 7
        %v714 = vsub.s32 7, %v713
        %v715 = vrot.slane %v371, %v714
        %v716 = vlaneseq
        %v717 = vshrl.u32 %v716, 7
        %v718 = vsub.s32 0, %v717
        %v719 = vrot.slane %v372, %v718
        %v720 = vlaneseq
        %v721 = vshrl.u32 %v720, 7
        %v722 = vsub.s32 1, %v721
        %v723 = vrot.slane %v372, %v722
        %v724 = vlaneseq
        %v725 = vshrl.u32 %v724, 7
        %v726 = vsub.s32 2, %v725
        %v727 = vrot.slane %v372, %v726
        %v728 = vlaneseq
        %v729 = vshrl.u32 %v728, 7
        %v730 = vsub.s32 3, %v729
        %v731 = vrot.slane %v372, %v730
        %v732 = vlaneseq
        %v733 = vshrl.u32 %v732, 7
        %v734 = vsub.s32 4, %v733
        %v735 = vrot.slane %v372, %v734
        %v736 = vlaneseq
        %v737 = vshrl.u32 %v736, 7
        %v738 = vsub.s32 5, %v737
        %v739 = vrot.slane %v372, %v738
        %v740 = vlaneseq
        %v741 = vshrl.u32 %v740, 7
        %v742 = vsub.s32 6, %v741
        %v743 = vrot.slane %v372, %v742
        %v744 = vlaneseq
        %v745 = vshrl.u32 %v744, 7
        %v746 = vsub.s32 7, %v745
        %v747 = vrot.slane %v372, %v746
        %v748 = vlaneseq
        %v749 = vshrl.u32 %v748, 7
        %v750 = vsub.s32 0, %v749
        %v751 = vrot.slane %v373, %v750
        %v752 = vlaneseq
        %v753 = vshrl.u32 %v752, 7
        %v754 = vsub.s32 1, %v753
        %v755 = vrot.slane %v373, %v754
        %v756 = vlaneseq
        %v757 = vshrl.u32 %v756, 7
        %v758 = vsub.s32 2, %v757
        %v759 = vrot.slane %v373, %v758
        %v760 = vlaneseq
        %v761 = vshrl.u32 %v760, 7
        %v762 = vsub.s32 3, %v761
        %v763 = vrot.slane %v373, %v762
        %v764 = vlaneseq
        %v765 = vshrl.u32 %v764, 7
        %v766 = vsub.s32 4, %v765
        %v767 = vrot.slane %v373, %v766
        %v768 = vlaneseq
        %v769 = vshrl.u32 %v768, 7
        %v770 = vsub.s32 5, %v769
        %v771 = vrot.slane %v373, %v770
        %v772 = vlaneseq
        %v773 = vshrl.u32 %v772, 7
        %v774 = vsub.s32 6, %v773
        %v775 = vrot.slane %v373, %v774
        %v776 = vlaneseq
        %v777 = vshrl.u32 %v776, 7
        %v778 = vsub.s32 7, %v777
        %v779 = vrot.slane %v373, %v778
        %v780 = vlaneseq
        %v781 = vshrl.u32 %v780, 7
        %v782 = vsub.s32 0, %v781
        %v783 = vrot.slane %v374, %v782
        %v784 = vlaneseq
        %v785 = vshrl.u32 %v784, 7
        %v786 = vsub.s32 1, %v785
        %v787 = vrot.slane %v374, %v786
        %v788 = vlaneseq
        %v789 = vshrl.u32 %v788, 7
        %v790 = vsub.s32 2, %v789
        %v791 = vrot.slane %v374, %v790
        %v792 = vlaneseq
        %v793 = vshrl.u32 %v792, 7
        %v794 = vsub.s32 3, %v793
        %v795 = vrot.slane %v374, %v794
        %v796 = vlaneseq
        %v797 = vshrl.u32 %v796, 7
        %v798 = vsub.s32 4, %v797
        %v799 = vrot.slane %v374, %v798
        %v800 = vlaneseq
        %v801 = vshrl.u32 %v800, 7
        %v802 = vsub.s32 5, %v801
        %v803 = vrot.slane %v374, %v802
        %v804 = vlaneseq
        %v805 = vshrl.u32 %v804, 7
        %v806 = vsub.s32 6, %v805
        %v807 = vrot.slane %v374, %v806
        %v808 = vlaneseq
        %v809 = vshrl.u32 %v808, 7
        %v810 = vsub.s32 7, %v809
        %v811 = vrot.slane %v374, %v810
        %v812 = vlaneseq
        %v813 = vshrl.u32 %v812, 7
        %v814 = vsub.s32 0, %v813
        %v815 = vrot.slane %v375, %v814
        %v816 = vlaneseq
        %v817 = vshrl.u32 %v816, 7
        %v818 = vsub.s32 1, %v817
        %v819 = vrot.slane %v375, %v818
        %v820 = vlaneseq
        %v821 = vshrl.u32 %v820, 7
        %v822 = vsub.s32 2, %v821
        %v823 = vrot.slane %v375, %v822
        %v824 = vlaneseq
        %v825 = vshrl.u32 %v824, 7
        %v826 = vsub.s32 3, %v825
        %v827 = vrot.slane %v375, %v826
        %v828 = vlaneseq
        %v829 = vshrl.u32 %v828, 7
        %v830 = vsub.s32 4, %v829
        %v831 = vrot.slane %v375, %v830
        %v832 = vlaneseq
        %v833 = vshrl.u32 %v832, 7
        %v834 = vsub.s32 5, %v833
        %v835 = vrot.slane %v375, %v834
        %v836 = vlaneseq
        %v837 = vshrl.u32 %v836, 7
        %v838 = vsub.s32 6, %v837
        %v839 = vrot.slane %v375, %v838
        %v840 = vlaneseq
        %v841 = vshrl.u32 %v840, 7
        %v842 = vsub.s32 7, %v841
        %v843 = vrot.slane %v375, %v842
        %v844 = vlaneseq
        %v845 = vshrl.u32 %v844, 7
        %v846 = vsub.s32 0, %v845
        %v847 = vrot.slane %v376, %v846
        %v848 = vlaneseq
        %v849 = vshrl.u32 %v848, 7
        %v850 = vsub.s32 1, %v849
        %v851 = vrot.slane %v376, %v850
        %v852 = vlaneseq
        %v853 = vshrl.u32 %v852, 7
        %v854 = vsub.s32 2, %v853
        %v855 = vrot.slane %v376, %v854
        %v856 = vlaneseq
        %v857 = vshrl.u32 %v856, 7
        %v858 = vsub.s32 3, %v857
        %v859 = vrot.slane %v376, %v858
        %v860 = vlaneseq
        %v861 = vshrl.u32 %v860, 7
        %v862 = vsub.s32 4, %v861
        %v863 = vrot.slane %v376, %v862
        %v864 = vlaneseq
        %v865 = vshrl.u32 %v864, 7
        %v866 = vsub.s32 5, %v865
        %v867 = vrot.slane %v376, %v866
        %v868 = vlaneseq
        %v869 = vshrl.u32 %v868, 7
        %v870 = vsub.s32 6, %v869
        %v871 = vrot.slane %v376, %v870
        %v872 = vlaneseq
        %v873 = vshrl.u32 %v872, 7
        %v874 = vsub.s32 7, %v873
        %v875 = vrot.slane %v376, %v874
        %v876 = vlaneseq
        %v877 = vshrl.u32 %v876, 7
        %v878 = vsub.s32 0, %v877
        %v879 = vrot.slane %v377, %v878
        %v880 = vlaneseq
        %v881 = vshrl.u32 %v880, 7
        %v882 = vsub.s32 1, %v881
        %v883 = vrot.slane %v377, %v882
        %v884 = vlaneseq
        %v885 = vshrl.u32 %v884, 7
        %v886 = vsub.s32 2, %v885
        %v887 = vrot.slane %v377, %v886
        %v888 = vlaneseq
        %v889 = vshrl.u32 %v888, 7
        %v890 = vsub.s32 3, %v889
        %v891 = vrot.slane %v377, %v890
        %v892 = vlaneseq
        %v893 = vshrl.u32 %v892, 7
        %v894 = vsub.s32 4, %v893
        %v895 = vrot.slane %v377, %v894
        %v896 = vlaneseq
        %v897 = vshrl.u32 %v896, 7
        %v898 = vsub.s32 5, %v897
        %v899 = vrot.slane %v377, %v898
        %v900 = vlaneseq
        %v901 = vshrl.u32 %v900, 7
        %v902 = vsub.s32 6, %v901
        %v903 = vrot.slane %v377, %v902
        %v904 = vlaneseq
        %v905 = vshrl.u32 %v904, 7
        %v906 = vsub.s32 7, %v905
        %v907 = vrot.slane %v377, %v906
        %v908 = vcombine.low %v399, %v403
        %v909 = vcombine.low %v407, %v411
        %v910 = vcombine.low %v415, %v419
        %v911 = vcombine.low %v423, %v427
        %v913 = vunpack.c.l.s4 1966171168
        %v914 = vunpack.c.0.s8 %v913
        %v915 = vlaneseq
        %v916 = vshrl.u32 %v915, 7
        %v917 = vsub.s32 %v914, %v916
        %v918 = vrot.slane %v908, %v917
        %v920 = vunpack.c.l.s4 1966171168
        %v921 = vunpack.c.0.s8 %v920
        %v922 = vlaneseq
        %v923 = vshrl.u32 %v922, 7
        %v924 = vsub.s32 %v921, %v923
        %v925 = vrot.slane %v909, %v924
        %v927 = vunpack.c.l.s4 1966171168
        %v928 = vunpack.c.0.s8 %v927
        %v929 = vlaneseq
        %v930 = vshrl.u32 %v929, 7
        %v931 = vsub.s32 %v928, %v930
        %v932 = vrot.slane %v910, %v931
        %v934 = vunpack.c.l.s4 1966171168
        %v935 = vunpack.c.0.s8 %v934
        %v936 = vlaneseq
        %v937 = vshrl.u32 %v936, 7
        %v938 = vsub.s32 %v935, %v937
        %v939 = vrot.slane %v911, %v938
        %v940 = vcombine.low %v918, %v925
        %v941 = vcombine.low %v932, %v939
        %v943 = vunpack.c.l.s4 1966171168
        %v944 = vunpack.c.0.s8 %v943
        %v945 = vlaneseq
        %v946 = vshrl.u32 %v945, 7
        %v947 = vsub.s32 %v944, %v946
        %v948 = vrot.slane %v940, %v947
        %v950 = vunpack.c.l.s4 1966171168
        %v951 = vunpack.c.0.s8 %v950
        %v952 = vlaneseq
        %v953 = vshrl.u32 %v952, 7
        %v954 = vsub.s32 %v951, %v953
        %v955 = vrot.slane %v941, %v954
        %v956 = vcombine.low %v948, %v955
        %v957 = vcombine.low %v431, %v435
        %v958 = vcombine.low %v439, %v443
        %v959 = vcombine.low %v447, %v451
        %v960 = vcombine.low %v455, %v459
        %v962 = vunpack.c.l.s4 1966171168
        %v963 = vunpack.c.0.s8 %v962
        %v964 = vlaneseq
        %v965 = vshrl.u32 %v964, 7
        %v966 = vsub.s32 %v963, %v965
        %v967 = vrot.slane %v957, %v966
        %v969 = vunpack.c.l.s4 1966171168
        %v970 = vunpack.c.0.s8 %v969
        %v971 = vlaneseq
        %v972 = vshrl.u32 %v971, 7
        %v973 = vsub.s32 %v970, %v972
        %v974 = vrot.slane %v958, %v973
        %v976 = vunpack.c.l.s4 1966171168
        %v977 = vunpack.c.0.s8 %v976
        %v978 = vlaneseq
        %v979 = vshrl.u32 %v978, 7
        %v980 = vsub.s32 %v977, %v979
        %v981 = vrot.slane %v959, %v980
        %v983 = vunpack.c.l.s4 1966171168
        %v984 = vunpack.c.0.s8 %v983
        %v985 = vlaneseq
        %v986 = vshrl.u32 %v985, 7
        %v987 = vsub.s32 %v984, %v986
        %v988 = vrot.slane %v960, %v987
        %v989 = vcombine.low %v967, %v974
        %v990 = vcombine.low %v981, %v988
        %v992 = vunpack.c.l.s4 1966171168
        %v993 = vunpack.c.0.s8 %v992
        %v994 = vlaneseq
        %v995 = vshrl.u32 %v994, 7
        %v996 = vsub.s32 %v993, %v995
        %v997 = vrot.slane %v989, %v996
        %v999 = vunpack.c.l.s4 1966171168
        %v1000 = vunpack.c.0.s8 %v999
        %v1001 = vlaneseq
        %v1002 = vshrl.u32 %v1001, 7
        %v1003 = vsub.s32 %v1000, %v1002
        %v1004 = vrot.slane %v990, %v1003
        %v1005 = vcombine.low %v997, %v1004
        %v1006 = vcombine.low %v463, %v467
        %v1007 = vcombine.low %v471, %v475
        %v1008 = vcombine.low %v479, %v483
        %v1009 = vcombine.low %v487, %v491
        %v1011 = vunpack.c.l.s4 1966171168
        %v1012 = vunpack.c.0.s8 %v1011
        %v1013 = vlaneseq
        %v1014 = vshrl.u32 %v1013, 7
        %v1015 = vsub.s32 %v1012, %v1014
        %v1016 = vrot.slane %v1006, %v1015
        %v1018 = vunpack.c.l.s4 1966171168
        %v1019 = vunpack.c.0.s8 %v1018
        %v1020 = vlaneseq
        %v1021 = vshrl.u32 %v1020, 7
        %v1022 = vsub.s32 %v1019, %v1021
        %v1023 = vrot.slane %v1007, %v1022
        %v1025 = vunpack.c.l.s4 1966171168
        %v1026 = vunpack.c.0.s8 %v1025
        %v1027 = vlaneseq
        %v1028 = vshrl.u32 %v1027, 7
        %v1029 = vsub.s32 %v1026, %v1028
        %v1030 = vrot.slane %v1008, %v1029
        %v1032 = vunpack.c.l.s4 1966171168
        %v1033 = vunpack.c.0.s8 %v1032
        %v1034 = vlaneseq
        %v1035 = vshrl.u32 %v1034, 7
        %v1036 = vsub.s32 %v1033, %v1035
        %v1037 = vrot.slane %v1009, %v1036
        %v1038 = vcombine.low %v1016, %v1023
        %v1039 = vcombine.low %v1030, %v1037
        %v1041 = vunpack.c.l.s4 1966171168
        %v1042 = vunpack.c.0.s8 %v1041
        %v1043 = vlaneseq
        %v1044 = vshrl.u32 %v1043, 7
        %v1045 = vsub.s32 %v1042, %v1044
        %v1046 = vrot.slane %v1038, %v1045
        %v1048 = vunpack.c.l.s4 1966171168
        %v1049 = vunpack.c.0.s8 %v1048
        %v1050 = vlaneseq
        %v1051 = vshrl.u32 %v1050, 7
        %v1052 = vsub.s32 %v1049, %v1051
        %v1053 = vrot.slane %v1039, %v1052
        %v1054 = vcombine.low %v1046, %v1053
        %v1055 = vcombine.low %v495, %v499
        %v1056 = vcombine.low %v503, %v507
        %v1057 = vcombine.low %v511, %v515
        %v1058 = vcombine.low %v519, %v523
        %v1060 = vunpack.c.l.s4 1966171168
        %v1061 = vunpack.c.0.s8 %v1060
        %v1062 = vlaneseq
        %v1063 = vshrl.u32 %v1062, 7
        %v1064 = vsub.s32 %v1061, %v1063
        %v1065 = vrot.slane %v1055, %v1064
        %v1067 = vunpack.c.l.s4 1966171168
        %v1068 = vunpack.c.0.s8 %v1067
        %v1069 = vlaneseq
        %v1070 = vshrl.u32 %v1069, 7
        %v1071 = vsub.s32 %v1068, %v1070
        %v1072 = vrot.slane %v1056, %v1071
        %v1074 = vunpack.c.l.s4 1966171168
        %v1075 = vunpack.c.0.s8 %v1074
        %v1076 = vlaneseq
        %v1077 = vshrl.u32 %v1076, 7
        %v1078 = vsub.s32 %v1075, %v1077
        %v1079 = vrot.slane %v1057, %v1078
        %v1081 = vunpack.c.l.s4 1966171168
        %v1082 = vunpack.c.0.s8 %v1081
        %v1083 = vlaneseq
        %v1084 = vshrl.u32 %v1083, 7
        %v1085 = vsub.s32 %v1082, %v1084
        %v1086 = vrot.slane %v1058, %v1085
        %v1087 = vcombine.low %v1065, %v1072
        %v1088 = vcombine.low %v1079, %v1086
        %v1090 = vunpack.c.l.s4 1966171168
        %v1091 = vunpack.c.0.s8 %v1090
        %v1092 = vlaneseq
        %v1093 = vshrl.u32 %v1092, 7
        %v1094 = vsub.s32 %v1091, %v1093
        %v1095 = vrot.slane %v1087, %v1094
        %v1097 = vunpack.c.l.s4 1966171168
        %v1098 = vunpack.c.0.s8 %v1097
        %v1099 = vlaneseq
        %v1100 = vshrl.u32 %v1099, 7
        %v1101 = vsub.s32 %v1098, %v1100
        %v1102 = vrot.slane %v1088, %v1101
        %v1103 = vcombine.low %v1095, %v1102
        %v1104 = vcombine.low %v527, %v531
        %v1105 = vcombine.low %v535, %v539
        %v1106 = vcombine.low %v543, %v547
        %v1107 = vcombine.low %v551, %v555
        %v1109 = vunpack.c.l.s4 1966171168
        %v1110 = vunpack.c.0.s8 %v1109
        %v1111 = vlaneseq
        %v1112 = vshrl.u32 %v1111, 7
        %v1113 = vsub.s32 %v1110, %v1112
        %v1114 = vrot.slane %v1104, %v1113
        %v1116 = vunpack.c.l.s4 1966171168
        %v1117 = vunpack.c.0.s8 %v1116
        %v1118 = vlaneseq
        %v1119 = vshrl.u32 %v1118, 7
        %v1120 = vsub.s32 %v1117, %v1119
        %v1121 = vrot.slane %v1105, %v1120
        %v1123 = vunpack.c.l.s4 1966171168
        %v1124 = vunpack.c.0.s8 %v1123
        %v1125 = vlaneseq
        %v1126 = vshrl.u32 %v1125, 7
        %v1127 = vsub.s32 %v1124, %v1126
        %v1128 = vrot.slane %v1106, %v1127
        %v1130 = vunpack.c.l.s4 1966171168
        %v1131 = vunpack.c.0.s8 %v1130
        %v1132 = vlaneseq
        %v1133 = vshrl.u32 %v1132, 7
        %v1134 = vsub.s32 %v1131, %v1133
        %v1135 = vrot.slane %v1107, %v1134
        %v1136 = vcombine.low %v1114, %v1121
        %v1137 = vcombine.low %v1128, %v1135
        %v1139 = vunpack.c.l.s4 1966171168
        %v1140 = vunpack.c.0.s8 %v1139
        %v1141 = vlaneseq
        %v1142 = vshrl.u32 %v1141, 7
        %v1143 = vsub.s32 %v1140, %v1142
        %v1144 = vrot.slane %v1136, %v1143
        %v1146 = vunpack.c.l.s4 1966171168
        %v1147 = vunpack.c.0.s8 %v1146
        %v1148 = vlaneseq
        %v1149 = vshrl.u32 %v1148, 7
        %v1150 = vsub.s32 %v1147, %v1149
        %v1151 = vrot.slane %v1137, %v1150
        %v1152 = vcombine.low %v1144, %v1151
        %v1153 = vcombine.low %v559, %v563
        %v1154 = vcombine.low %v567, %v571
        %v1155 = vcombine.low %v575, %v579
        %v1156 = vcombine.low %v583, %v587
        %v1158 = vunpack.c.l.s4 1966171168
        %v1159 = vunpack.c.0.s8 %v1158
        %v1160 = vlaneseq
        %v1161 = vshrl.u32 %v1160, 7
        %v1162 = vsub.s32 %v1159, %v1161
        %v1163 = vrot.slane %v1153, %v1162
        %v1165 = vunpack.c.l.s4 1966171168
        %v1166 = vunpack.c.0.s8 %v1165
        %v1167 = vlaneseq
        %v1168 = vshrl.u32 %v1167, 7
        %v1169 = vsub.s32 %v1166, %v1168
        %v1170 = vrot.slane %v1154, %v1169
        %v1172 = vunpack.c.l.s4 1966171168
        %v1173 = vunpack.c.0.s8 %v1172
        %v1174 = vlaneseq
        %v1175 = vshrl.u32 %v1174, 7
        %v1176 = vsub.s32 %v1173, %v1175
        %v1177 = vrot.slane %v1155, %v1176
        %v1179 = vunpack.c.l.s4 1966171168
        %v1180 = vunpack.c.0.s8 %v1179
        %v1181 = vlaneseq
        %v1182 = vshrl.u32 %v1181, 7
        %v1183 = vsub.s32 %v1180, %v1182
        %v1184 = vrot.slane %v1156, %v1183
        %v1185 = vcombine.low %v1163, %v1170
        %v1186 = vcombine.low %v1177, %v1184
        %v1188 = vunpack.c.l.s4 1966171168
        %v1189 = vunpack.c.0.s8 %v1188
        %v1190 = vlaneseq
        %v1191 = vshrl.u32 %v1190, 7
        %v1192 = vsub.s32 %v1189, %v1191
        %v1193 = vrot.slane %v1185, %v1192
        %v1195 = vunpack.c.l.s4 1966171168
        %v1196 = vunpack.c.0.s8 %v1195
        %v1197 = vlaneseq
        %v1198 = vshrl.u32 %v1197, 7
        %v1199 = vsub.s32 %v1196, %v1198
        %v1200 = vrot.slane %v1186, %v1199
        %v1201 = vcombine.low %v1193, %v1200
        %v1202 = vcombine.low %v591, %v595
        %v1203 = vcombine.low %v599, %v603
        %v1204 = vcombine.low %v607, %v611
        %v1205 = vcombine.low %v615, %v619
        %v1207 = vunpack.c.l.s4 1966171168
        %v1208 = vunpack.c.0.s8 %v1207
        %v1209 = vlaneseq
        %v1210 = vshrl.u32 %v1209, 7
        %v1211 = vsub.s32 %v1208, %v1210
        %v1212 = vrot.slane %v1202, %v1211
        %v1214 = vunpack.c.l.s4 1966171168
        %v1215 = vunpack.c.0.s8 %v1214
        %v1216 = vlaneseq
        %v1217 = vshrl.u32 %v1216, 7
        %v1218 = vsub.s32 %v1215, %v1217
        %v1219 = vrot.slane %v1203, %v1218
        %v1221 = vunpack.c.l.s4 1966171168
        %v1222 = vunpack.c.0.s8 %v1221
        %v1223 = vlaneseq
        %v1224 = vshrl.u32 %v1223, 7
        %v1225 = vsub.s32 %v1222, %v1224
        %v1226 = vrot.slane %v1204, %v1225
        %v1228 = vunpack.c.l.s4 1966171168
        %v1229 = vunpack.c.0.s8 %v1228
        %v1230 = vlaneseq
        %v1231 = vshrl.u32 %v1230, 7
        %v1232 = vsub.s32 %v1229, %v1231
        %v1233 = vrot.slane %v1205, %v1232
        %v1234 = vcombine.low %v1212, %v1219
        %v1235 = vcombine.low %v1226, %v1233
        %v1237 = vunpack.c.l.s4 1966171168
        %v1238 = vunpack.c.0.s8 %v1237
        %v1239 = vlaneseq
        %v1240 = vshrl.u32 %v1239, 7
        %v1241 = vsub.s32 %v1238, %v1240
        %v1242 = vrot.slane %v1234, %v1241
        %v1244 = vunpack.c.l.s4 1966171168
        %v1245 = vunpack.c.0.s8 %v1244
        %v1246 = vlaneseq
        %v1247 = vshrl.u32 %v1246, 7
        %v1248 = vsub.s32 %v1245, %v1247
        %v1249 = vrot.slane %v1235, %v1248
        %v1250 = vcombine.low %v1242, %v1249
        %v1251 = vcombine.low %v623, %v627
        %v1252 = vcombine.low %v631, %v635
        %v1253 = vcombine.low %v639, %v643
        %v1254 = vcombine.low %v647, %v651
        %v1256 = vunpack.c.l.s4 1966171168
        %v1257 = vunpack.c.0.s8 %v1256
        %v1258 = vlaneseq
        %v1259 = vshrl.u32 %v1258, 7
        %v1260 = vsub.s32 %v1257, %v1259
        %v1261 = vrot.slane %v1251, %v1260
        %v1263 = vunpack.c.l.s4 1966171168
        %v1264 = vunpack.c.0.s8 %v1263
        %v1265 = vlaneseq
        %v1266 = vshrl.u32 %v1265, 7
        %v1267 = vsub.s32 %v1264, %v1266
        %v1268 = vrot.slane %v1252, %v1267
        %v1270 = vunpack.c.l.s4 1966171168
        %v1271 = vunpack.c.0.s8 %v1270
        %v1272 = vlaneseq
        %v1273 = vshrl.u32 %v1272, 7
        %v1274 = vsub.s32 %v1271, %v1273
        %v1275 = vrot.slane %v1253, %v1274
        %v1277 = vunpack.c.l.s4 1966171168
        %v1278 = vunpack.c.0.s8 %v1277
        %v1279 = vlaneseq
        %v1280 = vshrl.u32 %v1279, 7
        %v1281 = vsub.s32 %v1278, %v1280
        %v1282 = vrot.slane %v1254, %v1281
        %v1283 = vcombine.low %v1261, %v1268
        %v1284 = vcombine.low %v1275, %v1282
        %v1286 = vunpack.c.l.s4 1966171168
        %v1287 = vunpack.c.0.s8 %v1286
        %v1288 = vlaneseq
        %v1289 = vshrl.u32 %v1288, 7
        %v1290 = vsub.s32 %v1287, %v1289
        %v1291 = vrot.slane %v1283, %v1290
        %v1293 = vunpack.c.l.s4 1966171168
        %v1294 = vunpack.c.0.s8 %v1293
        %v1295 = vlaneseq
        %v1296 = vshrl.u32 %v1295, 7
        %v1297 = vsub.s32 %v1294, %v1296
        %v1298 = vrot.slane %v1284, %v1297
        %v1299 = vcombine.low %v1291, %v1298
        %v1300 = vcombine.low %v655, %v659
        %v1301 = vcombine.low %v663, %v667
        %v1302 = vcombine.low %v671, %v675
        %v1303 = vcombine.low %v679, %v683
        %v1305 = vunpack.c.l.s4 1966171168
        %v1306 = vunpack.c.0.s8 %v1305
        %v1307 = vlaneseq
        %v1308 = vshrl.u32 %v1307, 7
        %v1309 = vsub.s32 %v1306, %v1308
        %v1310 = vrot.slane %v1300, %v1309
        %v1312 = vunpack.c.l.s4 1966171168
        %v1313 = vunpack.c.0.s8 %v1312
        %v1314 = vlaneseq
        %v1315 = vshrl.u32 %v1314, 7
        %v1316 = vsub.s32 %v1313, %v1315
        %v1317 = vrot.slane %v1301, %v1316
        %v1319 = vunpack.c.l.s4 1966171168
        %v1320 = vunpack.c.0.s8 %v1319
        %v1321 = vlaneseq
        %v1322 = vshrl.u32 %v1321, 7
        %v1323 = vsub.s32 %v1320, %v1322
        %v1324 = vrot.slane %v1302, %v1323
        %v1326 = vunpack.c.l.s4 1966171168
        %v1327 = vunpack.c.0.s8 %v1326
        %v1328 = vlaneseq
        %v1329 = vshrl.u32 %v1328, 7
        %v1330 = vsub.s32 %v1327, %v1329
        %v1331 = vrot.slane %v1303, %v1330
        %v1332 = vcombine.low %v1310, %v1317
        %v1333 = vcombine.low %v1324, %v1331
        %v1335 = vunpack.c.l.s4 1966171168
        %v1336 = vunpack.c.0.s8 %v1335
        %v1337 = vlaneseq
        %v1338 = vshrl.u32 %v1337, 7
        %v1339 = vsub.s32 %v1336, %v1338
        %v1340 = vrot.slane %v1332, %v1339
        %v1342 = vunpack.c.l.s4 1966171168
        %v1343 = vunpack.c.0.s8 %v1342
        %v1344 = vlaneseq
        %v1345 = vshrl.u32 %v1344, 7
        %v1346 = vsub.s32 %v1343, %v1345
        %v1347 = vrot.slane %v1333, %v1346
        %v1348 = vcombine.low %v1340, %v1347
        %v1349 = vcombine.low %v687, %v691
        %v1350 = vcombine.low %v695, %v699
        %v1351 = vcombine.low %v703, %v707
        %v1352 = vcombine.low %v711, %v715
        %v1354 = vunpack.c.l.s4 1966171168
        %v1355 = vunpack.c.0.s8 %v1354
        %v1356 = vlaneseq
        %v1357 = vshrl.u32 %v1356, 7
        %v1358 = vsub.s32 %v1355, %v1357
        %v1359 = vrot.slane %v1349, %v1358
        %v1361 = vunpack.c.l.s4 1966171168
        %v1362 = vunpack.c.0.s8 %v1361
        %v1363 = vlaneseq
        %v1364 = vshrl.u32 %v1363, 7
        %v1365 = vsub.s32 %v1362, %v1364
        %v1366 = vrot.slane %v1350, %v1365
        %v1368 = vunpack.c.l.s4 1966171168
        %v1369 = vunpack.c.0.s8 %v1368
        %v1370 = vlaneseq
        %v1371 = vshrl.u32 %v1370, 7
        %v1372 = vsub.s32 %v1369, %v1371
        %v1373 = vrot.slane %v1351, %v1372
        %v1375 = vunpack.c.l.s4 1966171168
        %v1376 = vunpack.c.0.s8 %v1375
        %v1377 = vlaneseq
        %v1378 = vshrl.u32 %v1377, 7
        %v1379 = vsub.s32 %v1376, %v1378
        %v1380 = vrot.slane %v1352, %v1379
        %v1381 = vcombine.low %v1359, %v1366
        %v1382 = vcombine.low %v1373, %v1380
        %v1384 = vunpack.c.l.s4 1966171168
        %v1385 = vunpack.c.0.s8 %v1384
        %v1386 = vlaneseq
        %v1387 = vshrl.u32 %v1386, 7
        %v1388 = vsub.s32 %v1385, %v1387
        %v1389 = vrot.slane %v1381, %v1388
        %v1391 = vunpack.c.l.s4 1966171168
        %v1392 = vunpack.c.0.s8 %v1391
        %v1393 = vlaneseq
        %v1394 = vshrl.u32 %v1393, 7
        %v1395 = vsub.s32 %v1392, %v1394
        %v1396 = vrot.slane %v1382, %v1395
        %v1397 = vcombine.low %v1389, %v1396
        %v1398 = vcombine.low %v719, %v723
        %v1399 = vcombine.low %v727, %v731
        %v1400 = vcombine.low %v735, %v739
        %v1401 = vcombine.low %v743, %v747
        %v1403 = vunpack.c.l.s4 1966171168
        %v1404 = vunpack.c.0.s8 %v1403
        %v1405 = vlaneseq
        %v1406 = vshrl.u32 %v1405, 7
        %v1407 = vsub.s32 %v1404, %v1406
        %v1408 = vrot.slane %v1398, %v1407
        %v1410 = vunpack.c.l.s4 1966171168
        %v1411 = vunpack.c.0.s8 %v1410
        %v1412 = vlaneseq
        %v1413 = vshrl.u32 %v1412, 7
        %v1414 = vsub.s32 %v1411, %v1413
        %v1415 = vrot.slane %v1399, %v1414
        %v1417 = vunpack.c.l.s4 1966171168
        %v1418 = vunpack.c.0.s8 %v1417
        %v1419 = vlaneseq
        %v1420 = vshrl.u32 %v1419, 7
        %v1421 = vsub.s32 %v1418, %v1420
        %v1422 = vrot.slane %v1400, %v1421
        %v1424 = vunpack.c.l.s4 1966171168
        %v1425 = vunpack.c.0.s8 %v1424
        %v1426 = vlaneseq
        %v1427 = vshrl.u32 %v1426, 7
        %v1428 = vsub.s32 %v1425, %v1427
        %v1429 = vrot.slane %v1401, %v1428
        %v1430 = vcombine.low %v1408, %v1415
        %v1431 = vcombine.low %v1422, %v1429
        %v1433 = vunpack.c.l.s4 1966171168
        %v1434 = vunpack.c.0.s8 %v1433
        %v1435 = vlaneseq
        %v1436 = vshrl.u32 %v1435, 7
        %v1437 = vsub.s32 %v1434, %v1436
        %v1438 = vrot.slane %v1430, %v1437
        %v1440 = vunpack.c.l.s4 1966171168
        %v1441 = vunpack.c.0.s8 %v1440
        %v1442 = vlaneseq
        %v1443 = vshrl.u32 %v1442, 7
        %v1444 = vsub.s32 %v1441, %v1443
        %v1445 = vrot.slane %v1431, %v1444
        %v1446 = vcombine.low %v1438, %v1445
        %v1447 = vcombine.low %v751, %v755
        %v1448 = vcombine.low %v759, %v763
        %v1449 = vcombine.low %v767, %v771
        %v1450 = vcombine.low %v775, %v779
        %v1452 = vunpack.c.l.s4 1966171168
        %v1453 = vunpack.c.0.s8 %v1452
        %v1454 = vlaneseq
        %v1455 = vshrl.u32 %v1454, 7
        %v1456 = vsub.s32 %v1453, %v1455
        %v1457 = vrot.slane %v1447, %v1456
        %v1459 = vunpack.c.l.s4 1966171168
        %v1460 = vunpack.c.0.s8 %v1459
        %v1461 = vlaneseq
        %v1462 = vshrl.u32 %v1461, 7
        %v1463 = vsub.s32 %v1460, %v1462
        %v1464 = vrot.slane %v1448, %v1463
        %v1466 = vunpack.c.l.s4 1966171168
        %v1467 = vunpack.c.0.s8 %v1466
        %v1468 = vlaneseq
        %v1469 = vshrl.u32 %v1468, 7
        %v1470 = vsub.s32 %v1467, %v1469
        %v1471 = vrot.slane %v1449, %v1470
        %v1473 = vunpack.c.l.s4 1966171168
        %v1474 = vunpack.c.0.s8 %v1473
        %v1475 = vlaneseq
        %v1476 = vshrl.u32 %v1475, 7
        %v1477 = vsub.s32 %v1474, %v1476
        %v1478 = vrot.slane %v1450, %v1477
        %v1479 = vcombine.low %v1457, %v1464
        %v1480 = vcombine.low %v1471, %v1478
        %v1482 = vunpack.c.l.s4 1966171168
        %v1483 = vunpack.c.0.s8 %v1482
        %v1484 = vlaneseq
        %v1485 = vshrl.u32 %v1484, 7
        %v1486 = vsub.s32 %v1483, %v1485
        %v1487 = vrot.slane %v1479, %v1486
        %v1489 = vunpack.c.l.s4 1966171168
        %v1490 = vunpack.c.0.s8 %v1489
        %v1491 = vlaneseq
        %v1492 = vshrl.u32 %v1491, 7
        %v1493 = vsub.s32 %v1490, %v1492
        %v1494 = vrot.slane %v1480, %v1493
        %v1495 = vcombine.low %v1487, %v1494
        %v1496 = vcombine.low %v783, %v787
        %v1497 = vcombine.low %v791, %v795
        %v1498 = vcombine.low %v799, %v803
        %v1499 = vcombine.low %v807, %v811
        %v1501 = vunpack.c.l.s4 1966171168
        %v1502 = vunpack.c.0.s8 %v1501
        %v1503 = vlaneseq
        %v1504 = vshrl.u32 %v1503, 7
        %v1505 = vsub.s32 %v1502, %v1504
        %v1506 = vrot.slane %v1496, %v1505
        %v1508 = vunpack.c.l.s4 1966171168
        %v1509 = vunpack.c.0.s8 %v1508
        %v1510 = vlaneseq
        %v1511 = vshrl.u32 %v1510, 7
        %v1512 = vsub.s32 %v1509, %v1511
        %v1513 = vrot.slane %v1497, %v1512
        %v1515 = vunpack.c.l.s4 1966171168
        %v1516 = vunpack.c.0.s8 %v1515
        %v1517 = vlaneseq
        %v1518 = vshrl.u32 %v1517, 7
        %v1519 = vsub.s32 %v1516, %v1518
        %v1520 = vrot.slane %v1498, %v1519
        %v1522 = vunpack.c.l.s4 1966171168
        %v1523 = vunpack.c.0.s8 %v1522
        %v1524 = vlaneseq
        %v1525 = vshrl.u32 %v1524, 7
        %v1526 = vsub.s32 %v1523, %v1525
        %v1527 = vrot.slane %v1499, %v1526
        %v1528 = vcombine.low %v1506, %v1513
        %v1529 = vcombine.low %v1520, %v1527
        %v1531 = vunpack.c.l.s4 1966171168
        %v1532 = vunpack.c.0.s8 %v1531
        %v1533 = vlaneseq
        %v1534 = vshrl.u32 %v1533, 7
        %v1535 = vsub.s32 %v1532, %v1534
        %v1536 = vrot.slane %v1528, %v1535
        %v1538 = vunpack.c.l.s4 1966171168
        %v1539 = vunpack.c.0.s8 %v1538
        %v1540 = vlaneseq
        %v1541 = vshrl.u32 %v1540, 7
        %v1542 = vsub.s32 %v1539, %v1541
        %v1543 = vrot.slane %v1529, %v1542
        %v1544 = vcombine.low %v1536, %v1543
        %v1545 = vcombine.low %v815, %v819
        %v1546 = vcombine.low %v823, %v827
        %v1547 = vcombine.low %v831, %v835
        %v1548 = vcombine.low %v839, %v843
        %v1550 = vunpack.c.l.s4 1966171168
        %v1551 = vunpack.c.0.s8 %v1550
        %v1552 = vlaneseq
        %v1553 = vshrl.u32 %v1552, 7
        %v1554 = vsub.s32 %v1551, %v1553
        %v1555 = vrot.slane %v1545, %v1554
        %v1557 = vunpack.c.l.s4 1966171168
        %v1558 = vunpack.c.0.s8 %v1557
        %v1559 = vlaneseq
        %v1560 = vshrl.u32 %v1559, 7
        %v1561 = vsub.s32 %v1558, %v1560
        %v1562 = vrot.slane %v1546, %v1561
        %v1564 = vunpack.c.l.s4 1966171168
        %v1565 = vunpack.c.0.s8 %v1564
        %v1566 = vlaneseq
        %v1567 = vshrl.u32 %v1566, 7
        %v1568 = vsub.s32 %v1565, %v1567
        %v1569 = vrot.slane %v1547, %v1568
        %v1571 = vunpack.c.l.s4 1966171168
        %v1572 = vunpack.c.0.s8 %v1571
        %v1573 = vlaneseq
        %v1574 = vshrl.u32 %v1573, 7
        %v1575 = vsub.s32 %v1572, %v1574
        %v1576 = vrot.slane %v1548, %v1575
        %v1577 = vcombine.low %v1555, %v1562
        %v1578 = vcombine.low %v1569, %v1576
        %v1580 = vunpack.c.l.s4 1966171168
        %v1581 = vunpack.c.0.s8 %v1580
        %v1582 = vlaneseq
        %v1583 = vshrl.u32 %v1582, 7
        %v1584 = vsub.s32 %v1581, %v1583
        %v1585 = vrot.slane %v1577, %v1584
        %v1587 = vunpack.c.l.s4 1966171168
        %v1588 = vunpack.c.0.s8 %v1587
        %v1589 = vlaneseq
        %v1590 = vshrl.u32 %v1589, 7
        %v1591 = vsub.s32 %v1588, %v1590
        %v1592 = vrot.slane %v1578, %v1591
        %v1593 = vcombine.low %v1585, %v1592
        %v1594 = vcombine.low %v847, %v851
        %v1595 = vcombine.low %v855, %v859
        %v1596 = vcombine.low %v863, %v867
        %v1597 = vcombine.low %v871, %v875
        %v1599 = vunpack.c.l.s4 1966171168
        %v1600 = vunpack.c.0.s8 %v1599
        %v1601 = vlaneseq
        %v1602 = vshrl.u32 %v1601, 7
        %v1603 = vsub.s32 %v1600, %v1602
        %v1604 = vrot.slane %v1594, %v1603
        %v1606 = vunpack.c.l.s4 1966171168
        %v1607 = vunpack.c.0.s8 %v1606
        %v1608 = vlaneseq
        %v1609 = vshrl.u32 %v1608, 7
        %v1610 = vsub.s32 %v1607, %v1609
        %v1611 = vrot.slane %v1595, %v1610
        %v1613 = vunpack.c.l.s4 1966171168
        %v1614 = vunpack.c.0.s8 %v1613
        %v1615 = vlaneseq
        %v1616 = vshrl.u32 %v1615, 7
        %v1617 = vsub.s32 %v1614, %v1616
        %v1618 = vrot.slane %v1596, %v1617
        %v1620 = vunpack.c.l.s4 1966171168
        %v1621 = vunpack.c.0.s8 %v1620
        %v1622 = vlaneseq
        %v1623 = vshrl.u32 %v1622, 7
        %v1624 = vsub.s32 %v1621, %v1623
        %v1625 = vrot.slane %v1597, %v1624
        %v1626 = vcombine.low %v1604, %v1611
        %v1627 = vcombine.low %v1618, %v1625
        %v1629 = vunpack.c.l.s4 1966171168
        %v1630 = vunpack.c.0.s8 %v1629
        %v1631 = vlaneseq
        %v1632 = vshrl.u32 %v1631, 7
        %v1633 = vsub.s32 %v1630, %v1632
        %v1634 = vrot.slane %v1626, %v1633
        %v1636 = vunpack.c.l.s4 1966171168
        %v1637 = vunpack.c.0.s8 %v1636
        %v1638 = vlaneseq
        %v1639 = vshrl.u32 %v1638, 7
        %v1640 = vsub.s32 %v1637, %v1639
        %v1641 = vrot.slane %v1627, %v1640
        %v1642 = vcombine.low %v1634, %v1641
        %v1643 = vcombine.low %v879, %v883
        %v1644 = vcombine.low %v887, %v891
        %v1645 = vcombine.low %v895, %v899
        %v1646 = vcombine.low %v903, %v907
        %v1648 = vunpack.c.l.s4 1966171168
        %v1649 = vunpack.c.0.s8 %v1648
        %v1650 = vlaneseq
        %v1651 = vshrl.u32 %v1650, 7
        %v1652 = vsub.s32 %v1649, %v1651
        %v1653 = vrot.slane %v1643, %v1652
        %v1655 = vunpack.c.l.s4 1966171168
        %v1656 = vunpack.c.0.s8 %v1655
        %v1657 = vlaneseq
        %v1658 = vshrl.u32 %v1657, 7
        %v1659 = vsub.s32 %v1656, %v1658
        %v1660 = vrot.slane %v1644, %v1659
        %v1662 = vunpack.c.l.s4 1966171168
        %v1663 = vunpack.c.0.s8 %v1662
        %v1664 = vlaneseq
        %v1665 = vshrl.u32 %v1664, 7
        %v1666 = vsub.s32 %v1663, %v1665
        %v1667 = vrot.slane %v1645, %v1666
        %v1669 = vunpack.c.l.s4 1966171168
        %v1670 = vunpack.c.0.s8 %v1669
        %v1671 = vlaneseq
        %v1672 = vshrl.u32 %v1671, 7
        %v1673 = vsub.s32 %v1670, %v1672
        %v1674 = vrot.slane %v1646, %v1673
        %v1675 = vcombine.low %v1653, %v1660
        %v1676 = vcombine.low %v1667, %v1674
        %v1678 = vunpack.c.l.s4 1966171168
        %v1679 = vunpack.c.0.s8 %v1678
        %v1680 = vlaneseq
        %v1681 = vshrl.u32 %v1680, 7
        %v1682 = vsub.s32 %v1679, %v1681
        %v1683 = vrot.slane %v1675, %v1682
        %v1685 = vunpack.c.l.s4 1966171168
        %v1686 = vunpack.c.0.s8 %v1685
        %v1687 = vlaneseq
        %v1688 = vshrl.u32 %v1687, 7
        %v1689 = vsub.s32 %v1686, %v1688
        %v1690 = vrot.slane %v1676, %v1689
        %v1691 = vcombine.low %v1683, %v1690
        %1692 = vset.pattern.permute.xlu0 0
        %1693 = vperm.xlu0 %1692, %v956
        %v1694 = vpop.permute.xlu0 %1693
        %1695 = vset.pattern.permute.xlu0 0
        %1696 = vperm.xlu0 %1695, %v1005
        %v1697 = vpop.permute.xlu0 %1696
        %1698 = vset.pattern.permute.xlu0 0
        %1699 = vperm.xlu0 %1698, %v1054
        %v1700 = vpop.permute.xlu0 %1699
        %1701 = vset.pattern.permute.xlu0 0
        %1702 = vperm.xlu0 %1701, %v1103
        %v1703 = vpop.permute.xlu0 %1702
        %1704 = vset.pattern.permute.xlu0 0
        %1705 = vperm.xlu0 %1704, %v1152
        %v1706 = vpop.permute.xlu0 %1705
        %1707 = vset.pattern.permute.xlu0 0
        %1708 = vperm.xlu0 %1707, %v1201
        %v1709 = vpop.permute.xlu0 %1708
        %1710 = vset.pattern.permute.xlu0 0
        %1711 = vperm.xlu0 %1710, %v1250
        %v1712 = vpop.permute.xlu0 %1711
        %1713 = vset.pattern.permute.xlu0 0
        %1714 = vperm.xlu0 %1713, %v1299
        %v1715 = vpop.permute.xlu0 %1714
        %1716 = vset.pattern.permute.xlu0 0
        %1717 = vperm.xlu0 %1716, %v1348
        %v1718 = vpop.permute.xlu0 %1717
        %1719 = vset.pattern.permute.xlu0 0
        %1720 = vperm.xlu0 %1719, %v1397
        %v1721 = vpop.permute.xlu0 %1720
        %1722 = vset.pattern.permute.xlu0 0
        %1723 = vperm.xlu0 %1722, %v1446
        %v1724 = vpop.permute.xlu0 %1723
        %1725 = vset.pattern.permute.xlu0 0
        %1726 = vperm.xlu0 %1725, %v1495
        %v1727 = vpop.permute.xlu0 %1726
        %1728 = vset.pattern.permute.xlu0 0
        %1729 = vperm.xlu0 %1728, %v1544
        %v1730 = vpop.permute.xlu0 %1729
        %1731 = vset.pattern.permute.xlu0 0
        %1732 = vperm.xlu0 %1731, %v1593
        %v1733 = vpop.permute.xlu0 %1732
        %1734 = vset.pattern.permute.xlu0 0
        %1735 = vperm.xlu0 %1734, %v1642
        %v1736 = vpop.permute.xlu0 %1735
        %1737 = vset.pattern.permute.xlu0 0
        %1738 = vperm.xlu0 %1737, %v1691
        %v1739 = vpop.permute.xlu0 %1738
        %v1740 = vlaneseq
        %v1741 = vand.u32 %v1740, 127
        %v1742 = vlaneseq
        %v1743 = vshrl.u32 %v1742, 7
        %v1744 = vsub.s32 %v1741, %v1743
        %v1745 = vrot.slane %v1694, %v1744
        %v1746 = vadd.s32 %v1741, 4294967288
        %v1747 = vlaneseq
        %v1748 = vshrl.u32 %v1747, 7
        %v1749 = vsub.s32 %v1746, %v1748
        %v1750 = vrot.slane %v1697, %v1749
        %vm1751 = vcmask 130112
        %v1752 = vsel %vm1751, %v1750, %v1745
        %v1753 = vadd.s32 %v1741, 4294967280
        %v1754 = vlaneseq
        %v1755 = vshrl.u32 %v1754, 7
        %v1756 = vsub.s32 %v1753, %v1755
        %v1757 = vrot.slane %v1700, %v1756
        %vm1758 = vcmask 195712
        %v1759 = vsel %vm1758, %v1757, %v1752
        %v1760 = vadd.s32 %v1741, 4294967272
        %v1761 = vlaneseq
        %v1762 = vshrl.u32 %v1761, 7
        %v1763 = vsub.s32 %v1760, %v1762
        %v1764 = vrot.slane %v1703, %v1763
        %vm1765 = vcmask 261312
        %v1766 = vsel %vm1765, %v1764, %v1759
        %v1767 = vadd.s32 %v1741, 4294967264
        %v1768 = vlaneseq
        %v1769 = vshrl.u32 %v1768, 7
        %v1770 = vsub.s32 %v1767, %v1769
        %v1771 = vrot.slane %v1706, %v1770
        %vm1772 = vcmask 326912
        %v1773 = vsel %vm1772, %v1771, %v1766
        %v1774 = vadd.s32 %v1741, 4294967256
        %v1775 = vlaneseq
        %v1776 = vshrl.u32 %v1775, 7
        %v1777 = vsub.s32 %v1774, %v1776
        %v1778 = vrot.slane %v1709, %v1777
        %vm1779 = vcmask 392512
        %v1780 = vsel %vm1779, %v1778, %v1773
        %v1781 = vadd.s32 %v1741, 4294967248
        %v1782 = vlaneseq
        %v1783 = vshrl.u32 %v1782, 7
        %v1784 = vsub.s32 %v1781, %v1783
        %v1785 = vrot.slane %v1712, %v1784
        %vm1786 = vcmask 458112
        %v1787 = vsel %vm1786, %v1785, %v1780
        %v1788 = vadd.s32 %v1741, 4294967240
        %v1789 = vlaneseq
        %v1790 = vshrl.u32 %v1789, 7
        %v1791 = vsub.s32 %v1788, %v1790
        %v1792 = vrot.slane %v1715, %v1791
        %vm1793 = vcmask 523712
        %v1794 = vsel %vm1793, %v1792, %v1787
        %v1795 = vadd.s32 %v1741, 4294967232
        %v1796 = vlaneseq
        %v1797 = vshrl.u32 %v1796, 7
        %v1798 = vsub.s32 %v1795, %v1797
        %v1799 = vrot.slane %v1718, %v1798
        %vm1800 = vcmask 589312
        %v1801 = vsel %vm1800, %v1799, %v1794
        %v1802 = vadd.s32 %v1741, 4294967224
        %v1803 = vlaneseq
        %v1804 = vshrl.u32 %v1803, 7
        %v1805 = vsub.s32 %v1802, %v1804
        %v1806 = vrot.slane %v1721, %v1805
        %vm1807 = vcmask 654912
        %v1808 = vsel %vm1807, %v1806, %v1801
        %v1809 = vadd.s32 %v1741, 4294967216
        %v1810 = vlaneseq
        %v1811 = vshrl.u32 %v1810, 7
        %v1812 = vsub.s32 %v1809, %v1811
        %v1813 = vrot.slane %v1724, %v1812
        %vm1814 = vcmask 720512
        %v1815 = vsel %vm1814, %v1813, %v1808
        %v1816 = vadd.s32 %v1741, 4294967208
        %v1817 = vlaneseq
        %v1818 = vshrl.u32 %v1817, 7
        %v1819 = vsub.s32 %v1816, %v1818
        %v1820 = vrot.slane %v1727, %v1819
        %vm1821 = vcmask 786112
        %v1822 = vsel %vm1821, %v1820, %v1815
        %v1823 = vadd.s32 %v1741, 4294967200
        %v1824 = vlaneseq
        %v1825 = vshrl.u32 %v1824, 7
        %v1826 = vsub.s32 %v1823, %v1825
        %v1827 = vrot.slane %v1730, %v1826
        %vm1828 = vcmask 851712
        %v1829 = vsel %vm1828, %v1827, %v1822
        %v1830 = vadd.s32 %v1741, 4294967192
        %v1831 = vlaneseq
        %v1832 = vshrl.u32 %v1831, 7
        %v1833 = vsub.s32 %v1830, %v1832
        %v1834 = vrot.slane %v1733, %v1833
        %vm1835 = vcmask 917312
        %v1836 = vsel %vm1835, %v1834, %v1829
        %v1837 = vadd.s32 %v1741, 4294967184
        %v1838 = vlaneseq
        %v1839 = vshrl.u32 %v1838, 7
        %v1840 = vsub.s32 %v1837, %v1839
        %v1841 = vrot.slane %v1736, %v1840
        %vm1842 = vcmask 982912
        %v1843 = vsel %vm1842, %v1841, %v1836
        %v1844 = vadd.s32 %v1741, 4294967176
        %v1845 = vlaneseq
        %v1846 = vshrl.u32 %v1845, 7
        %v1847 = vsub.s32 %v1844, %v1846
        %v1848 = vrot.slane %v1739, %v1847
        %vm1849 = vcmask 1048512
        %v1850 = vsel %vm1849, %v1848, %v1843
        %v1852 = vunpack.c.l.s4 1966171168
        %v1853 = vunpack.c.0.s8 %v1852
        %v1854 = vlaneseq
        %v1855 = vshrl.u32 %v1854, 7
        %v1856 = vsub.s32 %v1853, %v1855
        %v1857 = vrot.slane %v1850, %v1856
        %v1859 = vunpack.c.l.s4 1966171168
        %v1860 = vunpack.c.0.s8 %v1859
        %v1861 = vlaneseq
        %v1862 = vshrl.u32 %v1861, 7
        %v1863 = vsub.s32 %v1860, %v1862
        %v1864 = vrot.slane %v1857, %v1863
        %v1866 = vsel %vm379, -inf, %v1864
        %1867 = vst [vmem:[%s244] sm:$0x1] %v1866
        %s1868 = sand.u32 %s143, 1
        %s1869 = scalar_lea.sflag [#allocation3], %s1868
        %s1870 = sand.u32 %s143, 1
        %s1871 = scalar_lea.vmem [#allocation2], %s1870
        // Predicated region
        $region37: #{tpu_custom_call.1} parent=35 // pred_check
          %p1872 = pneg %p153
        $region38: #{tpu_custom_call.1} parent=35 // pred_check_branch
          %1874 = sbr.rel (%p1872) target = $region40
        $region39: #{tpu_custom_call.1} parent=35 // pred_region
          %s1876 = ssub.s32 16, 16
          %1877 = vsyncadd %s1869, %s1876
          %s1878 = sadd.s32 %s23, %s22
          %s1879 = smul.addr %s1878, 16
          %s1880 = scalar_lea.hbm %s4, %s1879
          %s1882 = sshll.u32 %s1871, 4
          %s1883 = int_to_ptr.vmem [resolvable:$true] %s1882
          %1885 = dma.vmem_to_hbm [thread:$0]  %s1883, 16, %s1880, %s1869
        $region40: #{tpu_custom_call.1} parent=35 // pred_fallthru
          _
      $region36: #{tpu_custom_call.1} parent=5 // pred_fallthru
        _
      %p1886 = scmp.le.s32.totalorder 2, %s13
      // Predicated region
      $region41: #{tpu_custom_call.1} parent=5 // pred_check
        %p1887 = pneg %p1886
      $region42: #{tpu_custom_call.1} parent=5 // pred_check_branch
        %1889 = sbr.rel (%p1887) target = $region44
      $region43: #{tpu_custom_call.1} parent=5 // pred_region
        %s1890 = ssub.s32 %s13, 2
        // Predicated region
        $region45: #{tpu_custom_call.1} parent=43 // pred_check
          %p1891 = pneg %p159
        $region46: #{tpu_custom_call.1} parent=43 // pred_check_branch
          %1893 = sbr.rel (%p1891) target = $region48
        $region47: #{tpu_custom_call.1} parent=43 // pred_region
          %s1894 = sand.u32 %s144, 1
          %s1895 = scalar_lea.sflag [#allocation3], %s1894
          %s1896 = sand.u32 %s144, 1
          %s1897 = scalar_lea.vmem [#allocation2], %s1896
          %1898 = dma.done %s1895, 16
        $region48: #{tpu_custom_call.1} parent=43 // pred_fallthru
          _
      $region44: #{tpu_custom_call.1} parent=5 // pred_fallthru
        _
    $region6: #{tpu_custom_call.1} parent=1 // loop_footer
      %s17 = sadd.s32 1, %s13
    $region7: #{tpu_custom_call.1} parent=1 // loop_footer_branch
      %12 = sbr.rel target = $region3
    $region8: #{tpu_custom_call.1} parent=1 // loop_exit
      _
    %1899 = vsyncpa [#allocation3], 1
    %s1900 = scalar_lea.sflag [#allocation3], 1
    %1901 = vsyncpa %s1900, 1

</llo_original>
